<compile_context>
chip_gen: v7x
topology: tpu7x:2x2x1
jax: 0.10.0
libtpu: 0.0.40
codegen_flags: <defaults>
</compile_context>

<pallas_src>
import functools

import jax
import jax.numpy as jnp
from jax.experimental import pallas as pl
from jax.experimental.pallas import tpu as pltpu

LANE = 128


def _round_up(n, m):
    return ((n + m - 1) // m) * m


def _pad_axis(x, target, axis):
    pad = target - x.shape[axis]
    if pad <= 0:
        return x
    widths = [(0, 0)] * x.ndim
    widths[axis] = (0, pad)
    return jnp.pad(x, widths)


def _pick_tm(n, candidates=(512, 256, 128)):
    """Dst-node tile: as large as possible while keeping >= 2 grid steps on the
    'parallel' axis so v7x's two TensorCores both get work."""
    for c in candidates:
        if c < n and n % c == 0:
            return c
    return n


def _pick_tk(n, candidates=(2048, 1024, 512, 256)):
    """Src-node tile: large enough that each grid step moves a big adjacency
    slab (amortizes the ~0.35 us per-step overhead)."""
    for c in candidates:
        if c <= n and n % c == 0:
            return c
    return n


def _sage_conv_kernel(a_ref, hs_ref, hd_ref, rd_ref, w_ref, b_ref, o_ref,
                      acc_ref, self_ref, *, fp, apply_relu):
    """One (dst-tile i, src-tile k) grid step of a fused SAGEConv('mean') layer.

    a_ref   : (TM, TK)       int8  0/1 connectivity mask tile (dst rows, src cols)
    hs_ref  : (TK, Fp)       bf16  source-feature tile
    hd_ref  : (TM, Fp)       bf16  destination-feature tile (self term)
    rd_ref  : (TM, 1)        f32   reciprocal in-degree (mean = sum * 1/deg)
    w_ref   : (2*Fp, Fp_out) bf16  stacked [W_self; W_neigh]
    b_ref   : (1, Fp_out)    f32   bias
    o_ref   : (TM, Fp_out)         output tile (written at last k only)
    acc_ref : (TM, Fp)       f32   neighbor-sum accumulator (scratch)
    self_ref: (TM, Fp_out)   f32   self-term accumulator (scratch)
    """
    k = pl.program_id(1)

    # Partial neighbor aggregation over this src tile (MXU, f32 accumulation).
    # 0/1 mask values are exact in bf16; the in-kernel int8->bf16 cast keeps the
    # HBM stream at 1 byte/entry.
    a = a_ref[...].astype(jnp.bfloat16)
    part = jnp.dot(a, hs_ref[...], preferred_element_type=jnp.float32)

    @pl.when(k == 0)
    def _():
        acc_ref[...] = part  # direct assign: no zero-fill / read-modify pass
        # Self-term matmul once per dst tile, hidden under the k-loop DMA.
        self_ref[...] = jnp.dot(hd_ref[...], w_ref[pl.ds(0, fp), :],
                                preferred_element_type=jnp.float32)

    @pl.when(k > 0)
    def _():
        acc_ref[...] += part

    @pl.when(k == pl.num_programs(1) - 1)
    def _():
        # Mean aggregation: scale the summed neighbor features by f32 1/deg.
        neigh = (acc_ref[...] * rd_ref[...]).astype(jnp.bfloat16)
        out = (self_ref[...]
               + jnp.dot(neigh, w_ref[pl.ds(fp, fp), :],
                         preferred_element_type=jnp.float32)
               + b_ref[...])
        if apply_relu:
            out = jnp.maximum(out, 0.0)
        o_ref[...] = out.astype(o_ref.dtype)


def sage_conv(mask, h, recip_deg, w_stack, bias, *, apply_relu,
              out_dtype=jnp.float32):
    """One DGL-style SAGEConv('mean') layer on a dense 0/1 connectivity mask.

    mask      : (N_dst, N_src) int8   0/1 connectivity (dst rows, src cols)
    h         : (N_src, Fp)    bf16   lane-padded node features
    recip_deg : (N_dst, 1)     f32    1 / max(in-degree, 1)
    w_stack   : (2*Fp, Fp_out) bf16   stacked [W_self; W_neigh]
    bias      : (1, Fp_out)    f32
    """
    n_dst, n_src = mask.shape
    fp = h.shape[1]
    fp_out = w_stack.shape[1]
    assert w_stack.shape[0] == 2 * fp
    assert h.shape[0] == n_src
    assert n_dst <= n_src              # DGL block: dst nodes are a prefix of src
    assert fp % LANE == 0 and fp_out % LANE == 0

    tm = _pick_tm(n_dst)
    tk = _pick_tk(n_src)
    assert n_dst % tm == 0 and n_src % tk == 0
    grid_m = n_dst // tm

    kernel = functools.partial(_sage_conv_kernel, fp=fp, apply_relu=apply_relu)

    # bytes_accessed counts the (n_dst/tm)-fold re-streaming of H_src and the
    # separate dst-feature stream (scheduler hint only).
    cost = pl.CostEstimate(
        flops=2 * n_dst * n_src * fp + 4 * n_dst * fp * fp_out,
        transcendentals=0,
        bytes_accessed=int(
            mask.size * mask.dtype.itemsize
            + grid_m * h.size * h.dtype.itemsize          # H re-streamed per dst tile
            + n_dst * fp * h.dtype.itemsize               # dst (self) features
            + recip_deg.size * recip_deg.dtype.itemsize
            + w_stack.size * w_stack.dtype.itemsize
            + bias.size * bias.dtype.itemsize
            + n_dst * fp_out * jnp.dtype(out_dtype).itemsize),
    )

    return pl.pallas_call(
        kernel,
        out_shape=jax.ShapeDtypeStruct((n_dst, fp_out), out_dtype),
        grid_spec=pltpu.PrefetchScalarGridSpec(
            num_scalar_prefetch=0,
            grid=(grid_m, n_src // tk),
            in_specs=[
                pl.BlockSpec((tm, tk), lambda i, k: (i, k)),          # int8 mask tile
                pl.BlockSpec((tk, fp), lambda i, k: (k, 0)),          # src features
                pl.BlockSpec((tm, fp), lambda i, k: (i, 0)),          # dst features
                pl.BlockSpec((tm, 1), lambda i, k: (i, 0)),           # 1/deg (f32)
                pl.BlockSpec((2 * fp, fp_out), lambda i, k: (0, 0)),  # [W_self; W_neigh]
                pl.BlockSpec((1, fp_out), lambda i, k: (0, 0)),       # bias
            ],
            out_specs=pl.BlockSpec((tm, fp_out), lambda i, k: (i, 0)),
            scratch_shapes=[pltpu.VMEM((tm, fp), jnp.float32),        # neighbor sum
                            pltpu.VMEM((tm, fp_out), jnp.float32)],   # self term
        ),
        compiler_params=pltpu.CompilerParams(
            dimension_semantics=("parallel", "arbitrary"),
            # ~4 MiB actual footprint at tm=512/tk=2048; 32 MiB gives headroom on
            # every generation (v7x physical VMEM is 64 MiB).
            vmem_limit_bytes=32 * 1024 * 1024),
        cost_estimate=cost,
    )(mask, h, h, recip_deg, w_stack, bias)


# ---------------- one-time host-side preparation (hoisted out of forward) -----


def pack_layer_params(w_self, w_neigh, bias):
    """Pad weights to lane multiples, stack [W_self; W_neigh], cast to bf16."""
    fp_in = _round_up(w_self.shape[0], LANE)
    fp_out = _round_up(w_self.shape[1], LANE)
    ws = _pad_axis(_pad_axis(w_self, fp_in, 0), fp_out, 1)
    wn = _pad_axis(_pad_axis(w_neigh, fp_in, 0), fp_out, 1)
    w_stack = jnp.concatenate([ws, wn], axis=0).astype(jnp.bfloat16)
    b = _pad_axis(bias.reshape(1, -1).astype(jnp.float32), fp_out, 1)
    return w_stack, b


def prepare_graph(adj_bool, n_pad):
    """int8 0/1 connectivity mask + f32 reciprocal in-degree, padded to n_pad."""
    deg = jnp.maximum(adj_bool.sum(axis=1, keepdims=True), 1).astype(jnp.float32)
    rdeg = 1.0 / deg
    mask = _pad_axis(_pad_axis(adj_bool.astype(jnp.int8), n_pad, 0), n_pad, 1)
    rdeg = _pad_axis(rdeg, n_pad, 0)
    return mask, rdeg


def prepare_features(x, n_pad):
    """Zero-pad features to 128 lanes / n_pad nodes and cast to bf16 once."""
    fp = _round_up(x.shape[1], LANE)
    return _pad_axis(_pad_axis(x, fp, 1), n_pad, 0).astype(jnp.bfloat16)


def graphsage_forward(blocks, x, params):
    """GraphSAGE.forward: SAGEConv('mean') layers, relu on all but the last.
    dropout(p=0.0) after layers l != 0 is the identity and is omitted."""
    n_layers = len(params)
    h = x
    for l, ((mask, rdeg), (w_stack, b)) in enumerate(zip(blocks, params)):
        last = (l == n_layers - 1)
        h = sage_conv(mask, h, rdeg, w_stack, b,
                      apply_relu=not last,
                      out_dtype=jnp.float32 if last else jnp.bfloat16)
    return h


if __name__ == "__main__":
    N = 256                                  # number of graph nodes (full-graph blocks)
    in_feats, n_hidden, n_classes = 32, 32, 32

    key = jax.random.PRNGKey(0)
    k_x, k_adj, k0s, k0n, k1s, k1n = jax.random.split(key, 6)

    # node features
    x = jax.random.normal(k_x, (N, in_feats), jnp.float32)

    # deterministic random graph (no self loops); mean aggregator uses 1/deg.
    adj_bool = jax.random.bernoulli(k_adj, 0.1, (N, N)) & (~jnp.eye(N, dtype=bool))

    def init_linear(k, fin, fout):
        scale = 1.0 / jnp.sqrt(jnp.float32(fin))
        return jax.random.uniform(k, (fin, fout), jnp.float32, -scale, scale)

    raw_params = [
        (init_linear(k0s, in_feats, n_hidden),
         init_linear(k0n, in_feats, n_hidden),
         jnp.zeros((n_hidden,), jnp.float32)),
        (init_linear(k1s, n_hidden, n_classes),
         init_linear(k1n, n_hidden, n_classes),
         jnp.zeros((n_classes,), jnp.float32)),
    ]

    # One-time prep: mask/degree construction, padding, dtype casts (hoisted
    # out of the forward pass so no per-call cast traffic).
    n_pad = _round_up(N, LANE)
    blocks = [prepare_graph(adj_bool, n_pad)] * 2          # one "block" per layer
    params = [pack_layer_params(ws, wn, b) for ws, wn, b in raw_params]
    xp = prepare_features(x, n_pad)

    fwd = jax.jit(graphsage_forward)
    out_full = fwd(blocks, xp, params)
    jax.block_until_ready(out_full)
    out = out_full[:N, :n_classes]

    # pure-JAX reference mirroring the kernel's quantization points
    # (bf16 inputs to every matmul, f32 accumulation, f32 1/deg scaling).
    q = lambda a: a.astype(jnp.bfloat16).astype(jnp.float32)
    hi = jax.lax.Precision.HIGHEST
    deg = jnp.maximum(adj_bool.sum(axis=1, keepdims=True), 1).astype(jnp.float32)
    rdeg = 1.0 / deg
    maskf = adj_bool.astype(jnp.float32)

    def ref_layer(h, ws, wn, b, relu):
        hq = q(h)
        neigh = q(jnp.dot(maskf, hq, precision=hi) * rdeg)
        o = (jnp.dot(hq, q(ws), precision=hi)
             + jnp.dot(neigh, q(wn), precision=hi) + b)
        return jnp.maximum(o, 0.0) if relu else o

    h_ref = ref_layer(x, *raw_params[0], True)
    h_ref = ref_layer(h_ref, *raw_params[1], False)

    err = float(jnp.max(jnp.abs(out - h_ref)))
    assert err < 2e-2, err
    print("KERNEL_OK")
</pallas_src>

<mosaic_0001>
module attributes {stable_mosaic.version = 11 : i64} {
  func.func @_sage_conv_kernel(%arg0: i32, %arg1: i32, %arg2: memref<128x256xi8, #tpu.memory_space<vmem>>, %arg3: memref<256x128xbf16, #tpu.memory_space<vmem>>, %arg4: memref<128x128xbf16, #tpu.memory_space<vmem>>, %arg5: memref<128x1xf32, #tpu.memory_space<vmem>>, %arg6: memref<256x128xbf16, #tpu.memory_space<vmem>>, %arg7: memref<1x128xf32, #tpu.memory_space<vmem>>, %arg8: memref<128x128xf32, #tpu.memory_space<vmem>>, %arg9: memref<128x128xf32, #tpu.memory_space<vmem>>, %arg10: memref<128x128xf32, #tpu.memory_space<vmem>>) attributes {dimension_semantics = [#tpu.dimension_semantics<parallel>, #tpu.dimension_semantics<arbitrary>], iteration_bounds = array<i64: 2, 1>, scalar_prefetch = 0 : i64, scratch_operands = 2 : i64, tpu.core_type = #tpu.core_type<tc>, window_params = [{transform_indices = @transform_0, window_bounds = array<i64: 128, 256>}, {transform_indices = @transform_1, window_bounds = array<i64: 256, 128>}, {transform_indices = @transform_2, window_bounds = array<i64: 128, 128>}, {transform_indices = @transform_3, window_bounds = array<i64: 128, 1>}, {pipeline_mode = #tpu.pipeline_mode<synchronous>, transform_indices = @transform_4, window_bounds = array<i64: 256, 128>}, {pipeline_mode = #tpu.pipeline_mode<synchronous>, transform_indices = @transform_5, window_bounds = array<i64: 1, 128>}, {transform_indices = @transform_6, window_bounds = array<i64: 128, 128>}]} {
    %c0 = arith.constant 0 : index
    %c0_0 = arith.constant 0 : index
    %0 = vector.load %arg2[%c0, %c0_0] : memref<128x256xi8, #tpu.memory_space<vmem>>, vector<128x256xi8>
    %1 = arith.sitofp %0 : vector<128x256xi8> to vector<128x256xbf16>
    %c0_1 = arith.constant 0 : index
    %c0_2 = arith.constant 0 : index
    %2 = vector.load %arg3[%c0_1, %c0_2] : memref<256x128xbf16, #tpu.memory_space<vmem>>, vector<256x128xbf16>
    %cst = arith.constant dense<0.000000e+00> : vector<128x128xf32>
    %3 = tpu.matmul %1, %2, %cst {dimension_numbers = #tpu.dot_dimension_numbers<[1], [0], [0], [1], [0, 0, 1, 1], [], []>} : vector<128x256xbf16>, vector<256x128xbf16>, vector<128x128xf32> -> vector<128x128xf32>
    %c0_i32 = arith.constant 0 : i32
    %4 = arith.cmpi eq, %arg1, %c0_i32 : i32
    %5 = arith.extui %4 : i1 to i32
    %c0_i32_3 = arith.constant 0 : i32
    %6 = arith.cmpi ne, %5, %c0_i32_3 : i32
    scf.if %6 {
      %c0_8 = arith.constant 0 : index
      %c0_9 = arith.constant 0 : index
      %13 = vector.load %arg9[%c0_8, %c0_9] : memref<128x128xf32, #tpu.memory_space<vmem>>, vector<128x128xf32>
      tpu.vector_store %arg9[%c0_8, %c0_9], %3 {strides = array<i32>} : memref<128x128xf32, #tpu.memory_space<vmem>>, vector<128x128xf32>,
      %c0_10 = arith.constant 0 : index
      %c0_11 = arith.constant 0 : index
      %14 = vector.load %arg4[%c0_10, %c0_11] : memref<128x128xbf16, #tpu.memory_space<vmem>>, vector<128x128xbf16>
      %c0_12 = arith.constant 0 : index
      %c0_13 = arith.constant 0 : index
      %15 = vector.load %arg6[%c0_12, %c0_13] : memref<256x128xbf16, #tpu.memory_space<vmem>>, vector<128x128xbf16>
      %cst_14 = arith.constant dense<0.000000e+00> : vector<128x128xf32>
      %16 = tpu.matmul %14, %15, %cst_14 {dimension_numbers = #tpu.dot_dimension_numbers<[1], [0], [0], [1], [0, 0, 1, 1], [], []>} : vector<128x128xbf16>, vector<128x128xbf16>, vector<128x128xf32> -> vector<128x128xf32>
      %c0_15 = arith.constant 0 : index
      %c0_16 = arith.constant 0 : index
      %17 = vector.load %arg10[%c0_15, %c0_16] : memref<128x128xf32, #tpu.memory_space<vmem>>, vector<128x128xf32>
      tpu.vector_store %arg10[%c0_15, %c0_16], %16 {strides = array<i32>} : memref<128x128xf32, #tpu.memory_space<vmem>>, vector<128x128xf32>,
    } else {
    }
    %c0_i32_4 = arith.constant 0 : i32
    %7 = arith.cmpi sgt, %arg1, %c0_i32_4 : i32
    %8 = arith.extui %7 : i1 to i32
    %c0_i32_5 = arith.constant 0 : i32
    %9 = arith.cmpi ne, %8, %c0_i32_5 : i32
    scf.if %9 {
      %c0_8 = arith.constant 0 : index
      %c0_9 = arith.constant 0 : index
      %13 = vector.load %arg9[%c0_8, %c0_9] : memref<128x128xf32, #tpu.memory_space<vmem>>, vector<128x128xf32>
      %14 = arith.addf %13, %3 : vector<128x128xf32>
      %c0_10 = arith.constant 0 : index
      %c0_11 = arith.constant 0 : index
      %15 = vector.load %arg9[%c0_10, %c0_11] : memref<128x128xf32, #tpu.memory_space<vmem>>, vector<128x128xf32>
      tpu.vector_store %arg9[%c0_10, %c0_11], %14 {strides = array<i32>} : memref<128x128xf32, #tpu.memory_space<vmem>>, vector<128x128xf32>,
    } else {
    }
    %c0_i32_6 = arith.constant 0 : i32
    %10 = arith.cmpi eq, %arg1, %c0_i32_6 : i32
    %11 = arith.extui %10 : i1 to i32
    %c0_i32_7 = arith.constant 0 : i32
    %12 = arith.cmpi ne, %11, %c0_i32_7 : i32
    scf.if %12 {
      %c0_8 = arith.constant 0 : index
      %c0_9 = arith.constant 0 : index
      %13 = vector.load %arg9[%c0_8, %c0_9] : memref<128x128xf32, #tpu.memory_space<vmem>>, vector<128x128xf32>
      %c0_10 = arith.constant 0 : index
      %c0_11 = arith.constant 0 : index
      %14 = vector.load %arg5[%c0_10, %c0_11] : memref<128x1xf32, #tpu.memory_space<vmem>>, vector<128x1xf32>
      %15 = vector.broadcast %14 : vector<128x1xf32> to vector<128x128xf32>
      %16 = arith.mulf %13, %15 : vector<128x128xf32>
      %17 = arith.truncf %16 : vector<128x128xf32> to vector<128x128xbf16>
      %c0_12 = arith.constant 0 : index
      %c0_13 = arith.constant 0 : index
      %18 = vector.load %arg10[%c0_12, %c0_13] : memref<128x128xf32, #tpu.memory_space<vmem>>, vector<128x128xf32>
      %c128 = arith.constant 128 : index
      %c0_14 = arith.constant 0 : index
      %19 = vector.load %arg6[%c128, %c0_14] : memref<256x128xbf16, #tpu.memory_space<vmem>>, vector<128x128xbf16>
      %cst_15 = arith.constant dense<0.000000e+00> : vector<128x128xf32>
      %20 = tpu.matmul %17, %19, %cst_15 {dimension_numbers = #tpu.dot_dimension_numbers<[1], [0], [0], [1], [0, 0, 1, 1], [], []>} : vector<128x128xbf16>, vector<128x128xbf16>, vector<128x128xf32> -> vector<128x128xf32>
      %21 = arith.addf %18, %20 : vector<128x128xf32>
      %c0_16 = arith.constant 0 : index
      %c0_17 = arith.constant 0 : index
      %22 = vector.load %arg7[%c0_16, %c0_17] : memref<1x128xf32, #tpu.memory_space<vmem>>, vector<1x128xf32>
      %23 = vector.broadcast %22 : vector<1x128xf32> to vector<128x128xf32>
      %24 = arith.addf %21, %23 : vector<128x128xf32>
      %c0_18 = arith.constant 0 : index
      %c0_19 = arith.constant 0 : index
      %25 = vector.load %arg8[%c0_18, %c0_19] : memref<128x128xf32, #tpu.memory_space<vmem>>, vector<128x128xf32>
      tpu.vector_store %arg8[%c0_18, %c0_19], %24 {strides = array<i32>} : memref<128x128xf32, #tpu.memory_space<vmem>>, vector<128x128xf32>,
    } else {
    }
    return
  }
  func.func @transform_0(%arg0: i32, %arg1: i32) -> (i32, i32) {
    %c0_i32 = arith.constant 0 : i32
    return %arg0, %arg1 : i32, i32
  }
  func.func @transform_1(%arg0: i32, %arg1: i32) -> (i32, i32) {
    %c0_i32 = arith.constant 0 : i32
    %c0_i32_0 = arith.constant 0 : i32
    return %arg1, %c0_i32 : i32, i32
  }
  func.func @transform_2(%arg0: i32, %arg1: i32) -> (i32, i32) {
    %c0_i32 = arith.constant 0 : i32
    %c0_i32_0 = arith.constant 0 : i32
    return %arg0, %c0_i32 : i32, i32
  }
  func.func @transform_3(%arg0: i32, %arg1: i32) -> (i32, i32) {
    %c0_i32 = arith.constant 0 : i32
    %c0_i32_0 = arith.constant 0 : i32
    return %arg0, %c0_i32 : i32, i32
  }
  func.func @transform_4(%arg0: i32, %arg1: i32) -> (i32, i32) {
    %c0_i32 = arith.constant 0 : i32
    %c0_i32_0 = arith.constant 0 : i32
    %c0_i32_1 = arith.constant 0 : i32
    return %c0_i32, %c0_i32_0 : i32, i32
  }
  func.func @transform_5(%arg0: i32, %arg1: i32) -> (i32, i32) {
    %c0_i32 = arith.constant 0 : i32
    %c0_i32_0 = arith.constant 0 : i32
    %c0_i32_1 = arith.constant 0 : i32
    return %c0_i32, %c0_i32_0 : i32, i32
  }
  func.func @transform_6(%arg0: i32, %arg1: i32) -> (i32, i32) {
    %c0_i32 = arith.constant 0 : i32
    %c0_i32_0 = arith.constant 0 : i32
    return %arg0, %c0_i32 : i32, i32
  }
}

module attributes {stable_mosaic.version = 11 : i64} {
  func.func @_sage_conv_kernel(%arg0: i32, %arg1: i32, %arg2: memref<128x256xi8, #tpu.memory_space<vmem>>, %arg3: memref<256x128xbf16, #tpu.memory_space<vmem>>, %arg4: memref<128x128xbf16, #tpu.memory_space<vmem>>, %arg5: memref<128x1xf32, #tpu.memory_space<vmem>>, %arg6: memref<256x128xbf16, #tpu.memory_space<vmem>>, %arg7: memref<1x128xf32, #tpu.memory_space<vmem>>, %arg8: memref<128x128xbf16, #tpu.memory_space<vmem>>, %arg9: memref<128x128xf32, #tpu.memory_space<vmem>>, %arg10: memref<128x128xf32, #tpu.memory_space<vmem>>) attributes {dimension_semantics = [#tpu.dimension_semantics<parallel>, #tpu.dimension_semantics<arbitrary>], iteration_bounds = array<i64: 2, 1>, scalar_prefetch = 0 : i64, scratch_operands = 2 : i64, tpu.core_type = #tpu.core_type<tc>, window_params = [{transform_indices = @transform_0, window_bounds = array<i64: 128, 256>}, {transform_indices = @transform_1, window_bounds = array<i64: 256, 128>}, {transform_indices = @transform_2, window_bounds = array<i64: 128, 128>}, {transform_indices = @transform_3, window_bounds = array<i64: 128, 1>}, {pipeline_mode = #tpu.pipeline_mode<synchronous>, transform_indices = @transform_4, window_bounds = array<i64: 256, 128>}, {pipeline_mode = #tpu.pipeline_mode<synchronous>, transform_indices = @transform_5, window_bounds = array<i64: 1, 128>}, {transform_indices = @transform_6, window_bounds = array<i64: 128, 128>}]} {
    %c0 = arith.constant 0 : index
    %c0_0 = arith.constant 0 : index
    %0 = vector.load %arg2[%c0, %c0_0] : memref<128x256xi8, #tpu.memory_space<vmem>>, vector<128x256xi8>
    %1 = arith.sitofp %0 : vector<128x256xi8> to vector<128x256xbf16>
    %c0_1 = arith.constant 0 : index
    %c0_2 = arith.constant 0 : index
    %2 = vector.load %arg3[%c0_1, %c0_2] : memref<256x128xbf16, #tpu.memory_space<vmem>>, vector<256x128xbf16>
    %cst = arith.constant dense<0.000000e+00> : vector<128x128xf32>
    %3 = tpu.matmul %1, %2, %cst {dimension_numbers = #tpu.dot_dimension_numbers<[1], [0], [0], [1], [0, 0, 1, 1], [], []>} : vector<128x256xbf16>, vector<256x128xbf16>, vector<128x128xf32> -> vector<128x128xf32>
    %c0_i32 = arith.constant 0 : i32
    %4 = arith.cmpi eq, %arg1, %c0_i32 : i32
    %5 = arith.extui %4 : i1 to i32
    %c0_i32_3 = arith.constant 0 : i32
    %6 = arith.cmpi ne, %5, %c0_i32_3 : i32
    scf.if %6 {
      %c0_8 = arith.constant 0 : index
      %c0_9 = arith.constant 0 : index
      %13 = vector.load %arg9[%c0_8, %c0_9] : memref<128x128xf32, #tpu.memory_space<vmem>>, vector<128x128xf32>
      tpu.vector_store %arg9[%c0_8, %c0_9], %3 {strides = array<i32>} : memref<128x128xf32, #tpu.memory_space<vmem>>, vector<128x128xf32>,
      %c0_10 = arith.constant 0 : index
      %c0_11 = arith.constant 0 : index
      %14 = vector.load %arg4[%c0_10, %c0_11] : memref<128x128xbf16, #tpu.memory_space<vmem>>, vector<128x128xbf16>
      %c0_12 = arith.constant 0 : index
      %c0_13 = arith.constant 0 : index
      %15 = vector.load %arg6[%c0_12, %c0_13] : memref<256x128xbf16, #tpu.memory_space<vmem>>, vector<128x128xbf16>
      %cst_14 = arith.constant dense<0.000000e+00> : vector<128x128xf32>
      %16 = tpu.matmul %14, %15, %cst_14 {dimension_numbers = #tpu.dot_dimension_numbers<[1], [0], [0], [1], [0, 0, 1, 1], [], []>} : vector<128x128xbf16>, vector<128x128xbf16>, vector<128x128xf32> -> vector<128x128xf32>
      %c0_15 = arith.constant 0 : index
      %c0_16 = arith.constant 0 : index
      %17 = vector.load %arg10[%c0_15, %c0_16] : memref<128x128xf32, #tpu.memory_space<vmem>>, vector<128x128xf32>
      tpu.vector_store %arg10[%c0_15, %c0_16], %16 {strides = array<i32>} : memref<128x128xf32, #tpu.memory_space<vmem>>, vector<128x128xf32>,
    } else {
    }
    %c0_i32_4 = arith.constant 0 : i32
    %7 = arith.cmpi sgt, %arg1, %c0_i32_4 : i32
    %8 = arith.extui %7 : i1 to i32
    %c0_i32_5 = arith.constant 0 : i32
    %9 = arith.cmpi ne, %8, %c0_i32_5 : i32
    scf.if %9 {
      %c0_8 = arith.constant 0 : index
      %c0_9 = arith.constant 0 : index
      %13 = vector.load %arg9[%c0_8, %c0_9] : memref<128x128xf32, #tpu.memory_space<vmem>>, vector<128x128xf32>
      %14 = arith.addf %13, %3 : vector<128x128xf32>
      %c0_10 = arith.constant 0 : index
      %c0_11 = arith.constant 0 : index
      %15 = vector.load %arg9[%c0_10, %c0_11] : memref<128x128xf32, #tpu.memory_space<vmem>>, vector<128x128xf32>
      tpu.vector_store %arg9[%c0_10, %c0_11], %14 {strides = array<i32>} : memref<128x128xf32, #tpu.memory_space<vmem>>, vector<128x128xf32>,
    } else {
    }
    %c0_i32_6 = arith.constant 0 : i32
    %10 = arith.cmpi eq, %arg1, %c0_i32_6 : i32
    %11 = arith.extui %10 : i1 to i32
    %c0_i32_7 = arith.constant 0 : i32
    %12 = arith.cmpi ne, %11, %c0_i32_7 : i32
    scf.if %12 {
      %c0_8 = arith.constant 0 : index
      %c0_9 = arith.constant 0 : index
      %13 = vector.load %arg9[%c0_8, %c0_9] : memref<128x128xf32, #tpu.memory_space<vmem>>, vector<128x128xf32>
      %c0_10 = arith.constant 0 : index
      %c0_11 = arith.constant 0 : index
      %14 = vector.load %arg5[%c0_10, %c0_11] : memref<128x1xf32, #tpu.memory_space<vmem>>, vector<128x1xf32>
      %15 = vector.broadcast %14 : vector<128x1xf32> to vector<128x128xf32>
      %16 = arith.mulf %13, %15 : vector<128x128xf32>
      %17 = arith.truncf %16 : vector<128x128xf32> to vector<128x128xbf16>
      %c0_12 = arith.constant 0 : index
      %c0_13 = arith.constant 0 : index
      %18 = vector.load %arg10[%c0_12, %c0_13] : memref<128x128xf32, #tpu.memory_space<vmem>>, vector<128x128xf32>
      %c128 = arith.constant 128 : index
      %c0_14 = arith.constant 0 : index
      %19 = vector.load %arg6[%c128, %c0_14] : memref<256x128xbf16, #tpu.memory_space<vmem>>, vector<128x128xbf16>
      %cst_15 = arith.constant dense<0.000000e+00> : vector<128x128xf32>
      %20 = tpu.matmul %17, %19, %cst_15 {dimension_numbers = #tpu.dot_dimension_numbers<[1], [0], [0], [1], [0, 0, 1, 1], [], []>} : vector<128x128xbf16>, vector<128x128xbf16>, vector<128x128xf32> -> vector<128x128xf32>
      %21 = arith.addf %18, %20 : vector<128x128xf32>
      %c0_16 = arith.constant 0 : index
      %c0_17 = arith.constant 0 : index
      %22 = vector.load %arg7[%c0_16, %c0_17] : memref<1x128xf32, #tpu.memory_space<vmem>>, vector<1x128xf32>
      %23 = vector.broadcast %22 : vector<1x128xf32> to vector<128x128xf32>
      %24 = arith.addf %21, %23 : vector<128x128xf32>
      %cst_18 = arith.constant 0.000000e+00 : f32
      %25 = vector.broadcast %cst_18 : f32 to vector<128x128xf32>
      %26 = arith.maximumf %24, %25 : vector<128x128xf32>
      %27 = arith.truncf %26 : vector<128x128xf32> to vector<128x128xbf16>
      %c0_19 = arith.constant 0 : index
      %c0_20 = arith.constant 0 : index
      %28 = vector.load %arg8[%c0_19, %c0_20] : memref<128x128xbf16, #tpu.memory_space<vmem>>, vector<128x128xbf16>
      tpu.vector_store %arg8[%c0_19, %c0_20], %27 {strides = array<i32>} : memref<128x128xbf16, #tpu.memory_space<vmem>>, vector<128x128xbf16>,
    } else {
    }
    return
  }
  func.func @transform_0(%arg0: i32, %arg1: i32) -> (i32, i32) {
    %c0_i32 = arith.constant 0 : i32
    return %arg0, %arg1 : i32, i32
  }
  func.func @transform_1(%arg0: i32, %arg1: i32) -> (i32, i32) {
    %c0_i32 = arith.constant 0 : i32
    %c0_i32_0 = arith.constant 0 : i32
    return %arg1, %c0_i32 : i32, i32
  }
  func.func @transform_2(%arg0: i32, %arg1: i32) -> (i32, i32) {
    %c0_i32 = arith.constant 0 : i32
    %c0_i32_0 = arith.constant 0 : i32
    return %arg0, %c0_i32 : i32, i32
  }
  func.func @transform_3(%arg0: i32, %arg1: i32) -> (i32, i32) {
    %c0_i32 = arith.constant 0 : i32
    %c0_i32_0 = arith.constant 0 : i32
    return %arg0, %c0_i32 : i32, i32
  }
  func.func @transform_4(%arg0: i32, %arg1: i32) -> (i32, i32) {
    %c0_i32 = arith.constant 0 : i32
    %c0_i32_0 = arith.constant 0 : i32
    %c0_i32_1 = arith.constant 0 : i32
    return %c0_i32, %c0_i32_0 : i32, i32
  }
  func.func @transform_5(%arg0: i32, %arg1: i32) -> (i32, i32) {
    %c0_i32 = arith.constant 0 : i32
    %c0_i32_0 = arith.constant 0 : i32
    %c0_i32_1 = arith.constant 0 : i32
    return %c0_i32, %c0_i32_0 : i32, i32
  }
  func.func @transform_6(%arg0: i32, %arg1: i32) -> (i32, i32) {
    %c0_i32 = arith.constant 0 : i32
    %c0_i32_0 = arith.constant 0 : i32
    return %arg0, %c0_i32 : i32, i32
  }
}

</mosaic_0001>

<llo_original>
// kernel: graphsage_forward.2
$region0: #{graphsage_forward.2}
  #allocation0 [shape = 'u32[]', space=smem, size = 0x4, offset = 0x4, fixed_abs, tag = 'smem constant byte address 0x4 - core index']
  #allocation1 [shape = 'u32[144,128]{1,0:T(1,128)}', space=vmem, size = 0x12000, scoped, tag = 'internal scratch']
  #allocation2 [shape = 'f32[128,128]{1,0:T(8,128)}', space=vmem, size = 0x10000, scoped, tag = 'scratch operand']
  #allocation3 [shape = 'f32[128,128]{1,0:T(8,128)}', space=vmem, size = 0x10000, scoped, tag = 'scratch operand']
  %s0 = inlined_call_operand.vmem [shape: s8[256,256], index: 0, kind: input, shape index: {}]
  %s1 = inlined_call_operand.vmem [shape: bf16[256,128], index: 1, kind: input, shape index: {}, may-alias: {1,2}]
  %s2 = inlined_call_operand.vmem [shape: bf16[256,128], index: 2, kind: input, shape index: {}, may-alias: {1,2}]
  %s3 = inlined_call_operand.vmem [shape: f32[256,1], index: 3, kind: input, shape index: {}]
  %s4 = inlined_call_operand.hbm [shape: bf16[256,128], index: 4, kind: input, shape index: {}]
  %s5 = inlined_call_operand.vmem [shape: f32[1,128], index: 5, kind: input, shape index: {}]
  %s6 = inlined_call_operand.vmem [shape: bf16[256,128], index: 6, kind: output, shape index: {}]
  %s7 = sld [smem:[#allocation0]]
  $region73: #{graphsage_forward.2} parent=0
    _
  %s9 = ssub.s32 1, %s7
  %s10 = scalar_select 0, %s9, %s7
  $region1: #{graphsage_forward.2} parent=0
    #allocation4 [shape = 'u8[65536]{0}', space=vmem, size = 0x10000, scoped, tag = 'input window, operand 4, single buffered']
    #allocation5 [shape = 's32[2]{0}', space=sflag, size = 0x8, scoped, tag = 'scoped memory for graphsage_forward.2']
    %11 = vsyncpa [#allocation5], 0
    loop: start=0, step=1, limit=4
    $region2: #{graphsage_forward.2} parent=1 // loop_pre_header
      _
    $region3: #{graphsage_forward.2} parent=1 // loop_header
      %s13 = sphi 0, %s17
      %p14 = scmp.ge.s32.totalorder %s13, 4
      %s20 = sphi 0, %s32
      %s21 = sphi 0, %s28
      %s22 = sphi 0, %s20
      %s23 = sphi 0, %s21
      %s24 = sphi 0, %s22
      %s25 = sphi 0, %s23
      %s37 = sphi 0, %s39
      %s40 = sphi 0, %s37
      %s41 = sphi 0, %s40
      %s57 = sphi 0, %s41
      %s63 = sphi 0, %s65
      %s66 = sphi 0, %s63
      %s67 = sphi 0, %s66
      %s83 = sphi 0, %s67
      %s89 = sphi 0, %s91
      %s92 = sphi 0, %s89
      %s93 = sphi 0, %s92
      %s109 = sphi 0, %s93
      %s115 = sphi 0, %s117
      %s118 = sphi 0, %s115
      %s119 = sphi 0, %s118
      %s135 = sphi 0, %s119
      %s139 = sphi 0, %s139
      %s141 = sphi 0, %s139
      %s142 = sphi 0, %s141
      %s156 = sphi 0, %s142
      %s160 = sphi 0, %s160
      %s162 = sphi 0, %s160
      %s163 = sphi 0, %s162
      %s177 = sphi 0, %s163
      %s183 = sphi 0, %s185
      %s186 = sphi 0, %s183
      %s187 = sphi 0, %s186
      %s203 = sphi 0, %s187
    $region4: #{graphsage_forward.2} parent=1 // loop_header_branch
      %16 = sbr.rel (%p14) target = $region8
    $region5: #{graphsage_forward.2} parent=1 // loop_body
      %s18 = ssub.s32 %s13, 1
      %s19 = ssub.s32 %s13, 2
      %s26 = sadd.s32 1, %s21
      %p27 = scmp.ge.s32.totalorder %s26, 1
      %s28 = scalar_select %p27, 0, %s26
      %s29 = sadd.s32 1, %s20
      %s30 = scalar_select %p27, %s29, %s20
      %p31 = scmp.ge.s32.totalorder %s30, 2
      %s32 = scalar_select %p31, 0, %s30
      %s33 = ssub.s32 %s20, %s32
      %s34 = ssub.s32 %s21, %s28
      %s35 = sor.u32 %s33, %s34
      %p36 = scmp.eq.s32.totalorder %s35, 0
      %s38 = sadd.s32 %s37, 1
      %s39 = scalar_select %p36, %s37, %s38
      %p42 = pneg %p36
      %p43 = scmp.eq.s32.totalorder %s13, 1
      %p44 = por %p42, %p43
      %p45 = scmp.ne.s32.totalorder %s37, %s40
      %p46 = scmp.eq.s32.totalorder %s13, 0
      %p47 = por %p45, %p46
      %p48 = scmp.ne.s32.totalorder %s37, %s40
      %p49 = scmp.eq.s32.totalorder %s18, 1
      %p50 = por %p48, %p49
      %p51 = scmp.ne.s32.totalorder %s40, %s41
      %p52 = scmp.eq.s32.totalorder %s18, 0
      %p53 = por %p51, %p52
      %p54 = scmp.ne.s32.totalorder %s40, %s41
      %p55 = scmp.eq.s32.totalorder %s19, 1
      %p56 = por %p54, %p55
      %p58 = scmp.ne.s32.totalorder %s41, %s57
      %p59 = scmp.eq.s32.totalorder %s19, 0
      %p60 = por %p58, %p59
      %s61 = ssub.s32 %s21, %s28
      %p62 = scmp.eq.s32.totalorder %s61, 0
      %s64 = sadd.s32 %s63, 1
      %s65 = scalar_select %p62, %s63, %s64
      %p68 = pneg %p62
      %p69 = scmp.eq.s32.totalorder %s13, 1
      %p70 = por %p68, %p69
      %p71 = scmp.ne.s32.totalorder %s63, %s66
      %p72 = scmp.eq.s32.totalorder %s13, 0
      %p73 = por %p71, %p72
      %p74 = scmp.ne.s32.totalorder %s63, %s66
      %p75 = scmp.eq.s32.totalorder %s18, 1
      %p76 = por %p74, %p75
      %p77 = scmp.ne.s32.totalorder %s66, %s67
      %p78 = scmp.eq.s32.totalorder %s18, 0
      %p79 = por %p77, %p78
      %p80 = scmp.ne.s32.totalorder %s66, %s67
      %p81 = scmp.eq.s32.totalorder %s19, 1
      %p82 = por %p80, %p81
      %p84 = scmp.ne.s32.totalorder %s67, %s83
      %p85 = scmp.eq.s32.totalorder %s19, 0
      %p86 = por %p84, %p85
      %s87 = ssub.s32 %s20, %s32
      %p88 = scmp.eq.s32.totalorder %s87, 0
      %s90 = sadd.s32 %s89, 1
      %s91 = scalar_select %p88, %s89, %s90
      %p94 = pneg %p88
      %p95 = scmp.eq.s32.totalorder %s13, 1
      %p96 = por %p94, %p95
      %p97 = scmp.ne.s32.totalorder %s89, %s92
      %p98 = scmp.eq.s32.totalorder %s13, 0
      %p99 = por %p97, %p98
      %p100 = scmp.ne.s32.totalorder %s89, %s92
      %p101 = scmp.eq.s32.totalorder %s18, 1
      %p102 = por %p100, %p101
      %p103 = scmp.ne.s32.totalorder %s92, %s93
      %p104 = scmp.eq.s32.totalorder %s18, 0
      %p105 = por %p103, %p104
      %p106 = scmp.ne.s32.totalorder %s92, %s93
      %p107 = scmp.eq.s32.totalorder %s19, 1
      %p108 = por %p106, %p107
      %p110 = scmp.ne.s32.totalorder %s93, %s109
      %p111 = scmp.eq.s32.totalorder %s19, 0
      %p112 = por %p110, %p111
      %s113 = ssub.s32 %s20, %s32
      %p114 = scmp.eq.s32.totalorder %s113, 0
      %s116 = sadd.s32 %s115, 1
      %s117 = scalar_select %p114, %s115, %s116
      %p120 = pneg %p114
      %p121 = scmp.eq.s32.totalorder %s13, 1
      %p122 = por %p120, %p121
      %p123 = scmp.ne.s32.totalorder %s115, %s118
      %p124 = scmp.eq.s32.totalorder %s13, 0
      %p125 = por %p123, %p124
      %p126 = scmp.ne.s32.totalorder %s115, %s118
      %p127 = scmp.eq.s32.totalorder %s18, 1
      %p128 = por %p126, %p127
      %p129 = scmp.ne.s32.totalorder %s118, %s119
      %p130 = scmp.eq.s32.totalorder %s18, 0
      %p131 = por %p129, %p130
      %p132 = scmp.ne.s32.totalorder %s118, %s119
      %p133 = scmp.eq.s32.totalorder %s19, 1
      %p134 = por %p132, %p133
      %p136 = scmp.ne.s32.totalorder %s119, %s135
      %p137 = scmp.eq.s32.totalorder %s19, 0
      %p138 = por %p136, %p137
      %s140 = sadd.s32 %s139, 1
      %p143 = scmp.eq.s32.totalorder %s13, 1
      %p144 = scmp.ne.s32.totalorder %s139, %s141
      %p145 = scmp.eq.s32.totalorder %s13, 0
      %p146 = por %p144, %p145
      %p147 = scmp.ne.s32.totalorder %s139, %s141
      %p148 = scmp.eq.s32.totalorder %s18, 1
      %p149 = por %p147, %p148
      %p150 = scmp.ne.s32.totalorder %s141, %s142
      %p151 = scmp.eq.s32.totalorder %s18, 0
      %p152 = por %p150, %p151
      %p153 = scmp.ne.s32.totalorder %s141, %s142
      %p154 = scmp.eq.s32.totalorder %s19, 1
      %p155 = por %p153, %p154
      %p157 = scmp.ne.s32.totalorder %s142, %s156
      %p158 = scmp.eq.s32.totalorder %s19, 0
      %p159 = por %p157, %p158
      %s161 = sadd.s32 %s160, 1
      %p164 = scmp.eq.s32.totalorder %s13, 1
      %p165 = scmp.ne.s32.totalorder %s160, %s162
      %p166 = scmp.eq.s32.totalorder %s13, 0
      %p167 = por %p165, %p166
      %p168 = scmp.ne.s32.totalorder %s160, %s162
      %p169 = scmp.eq.s32.totalorder %s18, 1
      %p170 = por %p168, %p169
      %p171 = scmp.ne.s32.totalorder %s162, %s163
      %p172 = scmp.eq.s32.totalorder %s18, 0
      %p173 = por %p171, %p172
      %p174 = scmp.ne.s32.totalorder %s162, %s163
      %p175 = scmp.eq.s32.totalorder %s19, 1
      %p176 = por %p174, %p175
      %p178 = scmp.ne.s32.totalorder %s163, %s177
      %p179 = scmp.eq.s32.totalorder %s19, 0
      %p180 = por %p178, %p179
      %s181 = ssub.s32 %s20, %s32
      %p182 = scmp.eq.s32.totalorder %s181, 0
      %s184 = sadd.s32 %s183, 1
      %s185 = scalar_select %p182, %s183, %s184
      %p188 = pneg %p182
      %p189 = scmp.eq.s32.totalorder %s13, 1
      %p190 = por %p188, %p189
      %p191 = scmp.ne.s32.totalorder %s183, %s186
      %p192 = scmp.eq.s32.totalorder %s13, 0
      %p193 = por %p191, %p192
      %p194 = scmp.ne.s32.totalorder %s183, %s186
      %p195 = scmp.eq.s32.totalorder %s18, 1
      %p196 = por %p194, %p195
      %p197 = scmp.ne.s32.totalorder %s186, %s187
      %p198 = scmp.eq.s32.totalorder %s18, 0
      %p199 = por %p197, %p198
      %p200 = scmp.ne.s32.totalorder %s186, %s187
      %p201 = scmp.eq.s32.totalorder %s19, 1
      %p202 = por %p200, %p201
      %p204 = scmp.ne.s32.totalorder %s187, %s203
      %p205 = scmp.eq.s32.totalorder %s19, 0
      %p206 = por %p204, %p205
      %p207 = scmp.le.s32.totalorder 1, %s13
      %p208 = scmp.lt.s32.totalorder %s13, 3
      %p209 = pnand %p207, %p208
      %p210 = pneg %p209
      // Predicated region
      $region9: #{graphsage_forward.2} parent=5 // pred_check
        _
      $region10: #{graphsage_forward.2} parent=5 // pred_check_branch
        %212 = sbr.rel (%p209) target = $region12
      $region11: #{graphsage_forward.2} parent=5 // pred_region
        %s213 = ssub.s32 %s13, 1
        // Predicated region
        $region13: #{graphsage_forward.2} parent=11 // pred_check
          %p214 = pneg %p79
        $region14: #{graphsage_forward.2} parent=11 // pred_check_branch
          %216 = sbr.rel (%p214) target = $region16
        $region15: #{graphsage_forward.2} parent=11 // pred_region
          %s217 = smul.u32 32, %s23
          %p218 = scmp.lt.s32.totalorder %s217, 31
          %s219 = scalar_select %p218, %s217, 31
          %s220 = smul.addr %s219, 4
          %s221 = scalar_lea.vmem %s1, %s220
          %s222 = smul.u32 32, %s23
        $region16: #{graphsage_forward.2} parent=11 // pred_fallthru
          _
        // Predicated region
        $region17: #{graphsage_forward.2} parent=11 // pred_check
          %p223 = pneg %p152
        $region18: #{graphsage_forward.2} parent=11 // pred_check_branch
          %225 = sbr.rel (%p223) target = $region20
        $region19: #{graphsage_forward.2} parent=11 // pred_region
          %s227 = ssub.s32 2048, 2048
          %228 = vsyncadd [#allocation5], %s227
          %s229 = sshll.u32 [#allocation4], 4
          %s230 = int_to_ptr.vmem [resolvable:$true] %s229
          %235 = dma.hbm_to_vmem [thread:$0]  %s4, 2048, %s230, [#allocation5], 64, 64, 4
        $region20: #{graphsage_forward.2} parent=11 // pred_fallthru
          _
        // Predicated region
        $region21: #{graphsage_forward.2} parent=11 // pred_check
          %p236 = pneg %p173
        $region22: #{graphsage_forward.2} parent=11 // pred_check_branch
          %238 = sbr.rel (%p236) target = $region24
        $region23: #{graphsage_forward.2} parent=11 // pred_region
          _
        $region24: #{graphsage_forward.2} parent=11 // pred_fallthru
          _
      $region12: #{graphsage_forward.2} parent=5 // pred_fallthru
        _
      %p239 = scmp.lt.s32.totalorder %s13, 2
      // Predicated region
      $region25: #{graphsage_forward.2} parent=5 // pred_check
        %p240 = pneg %p239
      $region26: #{graphsage_forward.2} parent=5 // pred_check_branch
        %242 = sbr.rel (%p240) target = $region28
      $region27: #{graphsage_forward.2} parent=5 // pred_region
        // Predicated region
        $region29: #{graphsage_forward.2} parent=27 // pred_check
          %p243 = pneg %p47
        $region30: #{graphsage_forward.2} parent=27 // pred_check_branch
          %245 = sbr.rel (%p243) target = $region32
        $region31: #{graphsage_forward.2} parent=27 // pred_region
          %s246 = smul.u32 4, %s20
          %s247 = smul.u32 2, %s21
          %p248 = scmp.lt.s32.totalorder %s246, 7
          %s249 = scalar_select %p248, %s246, 7
          %p250 = scmp.lt.s32.totalorder %s247, 1
          %s251 = scalar_select %p250, %s247, 1
          %s252 = smul.addr %s249, 2
          %s253 = sadd.s32 %s251, %s252
          %s254 = smul.addr %s253, 8
          %s255 = scalar_lea.vmem %s0, %s254
          %s256 = smul.u32 4, %s20
          %s257 = smul.u32 2, %s21
        $region32: #{graphsage_forward.2} parent=27 // pred_fallthru
          _
        // Predicated region
        $region33: #{graphsage_forward.2} parent=27 // pred_check
          %p258 = pneg %p99
        $region34: #{graphsage_forward.2} parent=27 // pred_check_branch
          %260 = sbr.rel (%p258) target = $region36
        $region35: #{graphsage_forward.2} parent=27 // pred_region
          %s261 = smul.u32 16, %s20
          %p262 = scmp.lt.s32.totalorder %s261, 31
          %s263 = scalar_select %p262, %s261, 31
          %s264 = smul.addr %s263, 4
          %s265 = scalar_lea.vmem %s2, %s264
          %s266 = smul.u32 16, %s20
        $region36: #{graphsage_forward.2} parent=27 // pred_fallthru
          _
        // Predicated region
        $region37: #{graphsage_forward.2} parent=27 // pred_check
          %p267 = pneg %p125
        $region38: #{graphsage_forward.2} parent=27 // pred_check_branch
          %269 = sbr.rel (%p267) target = $region40
        $region39: #{graphsage_forward.2} parent=27 // pred_region
          %s270 = smul.u32 16, %s20
          %p271 = scmp.lt.s32.totalorder %s270, 31
          %s272 = scalar_select %p271, %s270, 31
          %s273 = smul.addr %s272, 8
          %s274 = scalar_lea.vmem %s3, %s273
          %s275 = smul.u32 16, %s20
        $region40: #{graphsage_forward.2} parent=27 // pred_fallthru
          _
      $region28: #{graphsage_forward.2} parent=5 // pred_fallthru
        _
      %p276 = scmp.le.s32.totalorder 1, %s13
      %p277 = scmp.lt.s32.totalorder %s13, 3
      %p278 = pnand %p276, %p277
      %p279 = pneg %p278
      // Predicated region
      $region41: #{graphsage_forward.2} parent=5 // pred_check
        _
      $region42: #{graphsage_forward.2} parent=5 // pred_check_branch
        %281 = sbr.rel (%p278) target = $region44
      $region43: #{graphsage_forward.2} parent=5 // pred_region
        %s282 = ssub.s32 %s13, 1
        // Predicated region
        $region45: #{graphsage_forward.2} parent=43 // pred_check
          %p283 = pneg %p152
        $region46: #{graphsage_forward.2} parent=43 // pred_check_branch
          %285 = sbr.rel (%p283) target = $region48
        $region47: #{graphsage_forward.2} parent=43 // pred_region
          %286 = dma.done [#allocation5], 2048
        $region48: #{graphsage_forward.2} parent=43 // pred_fallthru
          _
        %s287 = smul.u32 4, %s22
        %s288 = smul.u32 2, %s23
        %p289 = scmp.lt.s32.totalorder %s287, 7
        %s290 = scalar_select %p289, %s287, 7
        %p291 = scmp.lt.s32.totalorder %s288, 1
        %s292 = scalar_select %p291, %s288, 1
        %s293 = smul.addr %s290, 2
        %s294 = sadd.s32 %s292, %s293
        %s295 = smul.addr %s294, 8
        %s296 = scalar_lea.vmem %s0, %s295
        %p297 = pneg %p53
        %p298 = pneg %p50
        %s299 = smul.u32 32, %s23
        %p300 = scmp.lt.s32.totalorder %s299, 31
        %s301 = scalar_select %p300, %s299, 31
        %s302 = smul.addr %s301, 4
        %s303 = scalar_lea.vmem %s1, %s302
        %p304 = pneg %p79
        %p305 = pneg %p76
        %s306 = smul.u32 16, %s22
        %p307 = scmp.lt.s32.totalorder %s306, 31
        %s308 = scalar_select %p307, %s306, 31
        %s309 = smul.addr %s308, 4
        %s310 = scalar_lea.vmem %s2, %s309
        %p311 = pneg %p105
        %p312 = pneg %p102
        %s313 = smul.u32 16, %s22
        %p314 = scmp.lt.s32.totalorder %s313, 31
        %s315 = scalar_select %p314, %s313, 31
        %s316 = smul.addr %s315, 8
        %s317 = scalar_lea.vmem %s3, %s316
        %p318 = pneg %p131
        %p319 = pneg %p128
        %p320 = pneg %p152
        %p321 = pneg %p149
        %p322 = pneg %p173
        %p323 = pneg %p170
        %p324 = pneg %p199
        %p325 = pneg %p196
        %s326 = smul.u32 16, %s22
        %p327 = scmp.lt.s32.totalorder %s326, 31
        %s328 = scalar_select %p327, %s326, 31
        %s329 = smul.addr %s328, 4
        %s330 = scalar_lea.vmem %s6, %s329
        %s331 = smul.u32 4, %s22
        %s332 = smul.u32 2, %s23
        %p333 = scmp.lt.s32.totalorder %s331, 7
        %s334 = scalar_select %p333, %s331, 7
        %p335 = scmp.lt.s32.totalorder %s332, 1
        %s336 = scalar_select %p335, %s332, 1
        %s337 = smul.addr %s334, 2
        %s338 = sadd.s32 %s336, %s337
        %s339 = smul.addr %s338, 8
        %s340 = scalar_lea.vmem %s0, %s339
        %s341 = smul.u32 4, %s22
        %s342 = smul.u32 2, %s23
        %s343 = smul.u32 32, %s23
        %p344 = scmp.lt.s32.totalorder %s343, 31
        %s345 = scalar_select %p344, %s343, 31
        %s346 = smul.addr %s345, 4
        %s347 = scalar_lea.vmem %s1, %s346
        %s348 = smul.u32 32, %s23
        %s349 = smul.u32 16, %s22
        %p350 = scmp.lt.s32.totalorder %s349, 31
        %s351 = scalar_select %p350, %s349, 31
        %s352 = smul.addr %s351, 4
        %s353 = scalar_lea.vmem %s2, %s352
        %s354 = smul.u32 16, %s22
        %s355 = smul.u32 16, %s22
        %p356 = scmp.lt.s32.totalorder %s355, 31
        %s357 = scalar_select %p356, %s355, 31
        %s358 = smul.addr %s357, 8
        %s359 = scalar_lea.vmem %s3, %s358
        %s360 = smul.u32 16, %s22
        %s361 = smul.u32 16, %s22
        %p362 = scmp.lt.s32.totalorder %s361, 31
        %s363 = scalar_select %p362, %s361, 31
        %s364 = smul.addr %s363, 4
        %s365 = scalar_lea.vmem %s6, %s364
        %s366 = smul.u32 16, %s22
        %v368 = vld [vmem:[%s340] sm:$0xff]
        %v369 = vld [vmem:[%s340 + $0x8] sm:$0xff]
        %v370 = vld [vmem:[%s340 + $0x10] sm:$0xff]
        %v371 = vld [vmem:[%s340 + $0x18] sm:$0xff]
        %v372 = vld [vmem:[%s340 + $0x20] sm:$0xff]
        %v373 = vld [vmem:[%s340 + $0x28] sm:$0xff]
        %v374 = vld [vmem:[%s340 + $0x30] sm:$0xff]
        %v375 = vld [vmem:[%s340 + $0x38] sm:$0xff]
        %v376 = vunpack.c.l.s8.bf16 %v368
        %v377 = vunpack.c.l.s8.bf16 %v369
        %v378 = vunpack.c.h.s8.bf16 %v368
        %v379 = vunpack.c.h.s8.bf16 %v369
        %v380 = vunpack.c.l.s8.bf16 %v370
        %v381 = vunpack.c.l.s8.bf16 %v371
        %v382 = vunpack.c.h.s8.bf16 %v370
        %v383 = vunpack.c.h.s8.bf16 %v371
        %v384 = vunpack.c.l.s8.bf16 %v372
        %v385 = vunpack.c.l.s8.bf16 %v373
        %v386 = vunpack.c.h.s8.bf16 %v372
        %v387 = vunpack.c.h.s8.bf16 %v373
        %v388 = vunpack.c.l.s8.bf16 %v374
        %v389 = vunpack.c.l.s8.bf16 %v375
        %v390 = vunpack.c.h.s8.bf16 %v374
        %v391 = vunpack.c.h.s8.bf16 %v375
        %v392 = vld [vmem:[%s347] sm:$0xf]
        %v393 = vld [vmem:[%s347 + $0x4] sm:$0xf]
        %v394 = vld [vmem:[%s347 + $0x8] sm:$0xf]
        %v395 = vld [vmem:[%s347 + $0xc] sm:$0xf]
        %v396 = vld [vmem:[%s347 + $0x10] sm:$0xf]
        %v397 = vld [vmem:[%s347 + $0x14] sm:$0xf]
        %v398 = vld [vmem:[%s347 + $0x18] sm:$0xf]
        %v399 = vld [vmem:[%s347 + $0x1c] sm:$0xf]
        %v400 = vld [vmem:[%s347 + $0x20] sm:$0xf]
        %v401 = vld [vmem:[%s347 + $0x24] sm:$0xf]
        %v402 = vld [vmem:[%s347 + $0x28] sm:$0xf]
        %v403 = vld [vmem:[%s347 + $0x2c] sm:$0xf]
        %v404 = vld [vmem:[%s347 + $0x30] sm:$0xf]
        %v405 = vld [vmem:[%s347 + $0x34] sm:$0xf]
        %v406 = vld [vmem:[%s347 + $0x38] sm:$0xf]
        %v407 = vld [vmem:[%s347 + $0x3c] sm:$0xf]
        %v408 = vld [vmem:[%s347 + $0x40] sm:$0xf]
        %v409 = vld [vmem:[%s347 + $0x44] sm:$0xf]
        %v410 = vld [vmem:[%s347 + $0x48] sm:$0xf]
        %v411 = vld [vmem:[%s347 + $0x4c] sm:$0xf]
        %v412 = vld [vmem:[%s347 + $0x50] sm:$0xf]
        %v413 = vld [vmem:[%s347 + $0x54] sm:$0xf]
        %v414 = vld [vmem:[%s347 + $0x58] sm:$0xf]
        %v415 = vld [vmem:[%s347 + $0x5c] sm:$0xf]
        %v416 = vld [vmem:[%s347 + $0x60] sm:$0xf]
        %v417 = vld [vmem:[%s347 + $0x64] sm:$0xf]
        %v418 = vld [vmem:[%s347 + $0x68] sm:$0xf]
        %v419 = vld [vmem:[%s347 + $0x6c] sm:$0xf]
        %v420 = vld [vmem:[%s347 + $0x70] sm:$0xf]
        %v421 = vld [vmem:[%s347 + $0x74] sm:$0xf]
        %v422 = vld [vmem:[%s347 + $0x78] sm:$0xf]
        %v423 = vld [vmem:[%s347 + $0x7c] sm:$0xf]
        %v456 = vunpack.c.l.b16 %v392
        %v457 = vunpack.c.l.b16 %v393
        %v458 = vunpack.c.l.b16 %v394
        %v459 = vunpack.c.l.b16 %v395
        %v460 = vunpack.c.l.b16 %v396
        %v461 = vunpack.c.l.b16 %v397
        %v462 = vunpack.c.l.b16 %v398
        %v463 = vunpack.c.l.b16 %v399
        %v464 = vunpack.c.l.b16 %v400
        %v465 = vunpack.c.l.b16 %v401
        %v466 = vunpack.c.l.b16 %v402
        %v467 = vunpack.c.l.b16 %v403
        %v468 = vunpack.c.l.b16 %v404
        %v469 = vunpack.c.l.b16 %v405
        %v470 = vunpack.c.l.b16 %v406
        %v471 = vunpack.c.l.b16 %v407
        %v472 = vunpack.c.l.b16 %v408
        %v473 = vunpack.c.l.b16 %v409
        %v474 = vunpack.c.l.b16 %v410
        %v475 = vunpack.c.l.b16 %v411
        %v476 = vunpack.c.l.b16 %v412
        %v477 = vunpack.c.l.b16 %v413
        %v478 = vunpack.c.l.b16 %v414
        %v479 = vunpack.c.l.b16 %v415
        %v480 = vunpack.c.l.b16 %v416
        %v481 = vunpack.c.l.b16 %v417
        %v482 = vunpack.c.l.b16 %v418
        %v483 = vunpack.c.l.b16 %v419
        %v484 = vunpack.c.l.b16 %v420
        %v485 = vunpack.c.l.b16 %v421
        %v486 = vunpack.c.l.b16 %v422
        %v487 = vunpack.c.l.b16 %v423
        %v488 = vpack.c.b16 %v457, %v456
        %v489 = vpack.c.b16 %v459, %v458
        %v490 = vpack.c.b16 %v461, %v460
        %v491 = vpack.c.b16 %v463, %v462
        %v492 = vpack.c.b16 %v465, %v464
        %v493 = vpack.c.b16 %v467, %v466
        %v494 = vpack.c.b16 %v469, %v468
        %v495 = vpack.c.b16 %v471, %v470
        %v496 = vpack.c.b16 %v473, %v472
        %v497 = vpack.c.b16 %v475, %v474
        %v498 = vpack.c.b16 %v477, %v476
        %v499 = vpack.c.b16 %v479, %v478
        %v500 = vpack.c.b16 %v481, %v480
        %v501 = vpack.c.b16 %v483, %v482
        %v502 = vpack.c.b16 %v485, %v484
        %v503 = vpack.c.b16 %v487, %v486
        %520 = vmatprep.subr.bf16.mxu0 0
        %521 = vmatpush1.bf16.msra.mxu0 %v488
        %522 = vmatprep.subr.bf16.mxu0 0
        %523 = vmatpush1.bf16.msra.mxu0 %v489
        %524 = vmatprep.subr.bf16.mxu0 0
        %525 = vmatpush1.bf16.msra.mxu0 %v490
        %526 = vmatprep.subr.bf16.mxu0 0
        %527 = vmatpush1.bf16.msra.mxu0 %v491
        %528 = vmatprep.subr.bf16.mxu0 0
        %529 = vmatpush1.bf16.msra.mxu0 %v492
        %530 = vmatprep.subr.bf16.mxu0 0
        %531 = vmatpush1.bf16.msra.mxu0 %v493
        %532 = vmatprep.subr.bf16.mxu0 0
        %533 = vmatpush1.bf16.msra.mxu0 %v494
        %534 = vmatprep.subr.bf16.mxu0 0
        %535 = vmatpush1.bf16.msra.mxu0 %v495
        %536 = vmatprep.subr.bf16.mxu0 0
        %537 = vmatpush1.bf16.msra.mxu0 %v496
        %538 = vmatprep.subr.bf16.mxu0 0
        %539 = vmatpush1.bf16.msra.mxu0 %v497
        %540 = vmatprep.subr.bf16.mxu0 0
        %541 = vmatpush1.bf16.msra.mxu0 %v498
        %542 = vmatprep.subr.bf16.mxu0 0
        %543 = vmatpush1.bf16.msra.mxu0 %v499
        %544 = vmatprep.subr.bf16.mxu0 0
        %545 = vmatpush1.bf16.msra.mxu0 %v500
        %546 = vmatprep.subr.bf16.mxu0 0
        %547 = vmatpush1.bf16.msra.mxu0 %v501
        %548 = vmatprep.subr.bf16.mxu0 0
        %549 = vmatpush1.bf16.msra.mxu0 %v502
        %550 = vmatprep.subr.bf16.mxu0 0
        %551 = vmatpush1.bf16.msra.mxu0 %v503
        %552 = vmatprep.mubr.bf16.mxu0 %v377
        %553 = vmatmul.mubr.bf16.gmra.mrb[0].mxu0 %v376
        %v554 = vpop.f32.mrb[0].mxu0
        %v555 = vadd.f32 0.0, %v554
        %v556 = vpop.f32.mrb[0].mxu0
        %v557 = vpop.f32.mrb[0].mxu0
        %v558 = vadd.f32 0.0, %v557
        %v559 = vpop.f32.mrb[0].mxu0
        %560 = vmatprep.mubr.bf16.mxu0 %v379
        %561 = vmatmul.mubr.bf16.gmra.mrb[0].mxu0 %v378
        %v562 = vpop.f32.mrb[0].mxu0
        %v563 = vadd.f32 0.0, %v562
        %v564 = vpop.f32.mrb[0].mxu0
        %v565 = vpop.f32.mrb[0].mxu0
        %v566 = vadd.f32 0.0, %v565
        %v567 = vpop.f32.mrb[0].mxu0
        %568 = vmatprep.mubr.bf16.mxu0 %v381
        %569 = vmatmul.mubr.bf16.gmra.mrb[0].mxu0 %v380
        %v570 = vpop.f32.mrb[0].mxu0
        %v571 = vadd.f32 0.0, %v570
        %v572 = vpop.f32.mrb[0].mxu0
        %v573 = vpop.f32.mrb[0].mxu0
        %v574 = vadd.f32 0.0, %v573
        %v575 = vpop.f32.mrb[0].mxu0
        %576 = vmatprep.mubr.bf16.mxu0 %v383
        %577 = vmatmul.mubr.bf16.gmra.mrb[0].mxu0 %v382
        %v578 = vpop.f32.mrb[0].mxu0
        %v579 = vadd.f32 0.0, %v578
        %v580 = vpop.f32.mrb[0].mxu0
        %v581 = vpop.f32.mrb[0].mxu0
        %v582 = vadd.f32 0.0, %v581
        %v583 = vpop.f32.mrb[0].mxu0
        %584 = vmatprep.mubr.bf16.mxu0 %v385
        %585 = vmatmul.mubr.bf16.gmra.mrb[0].mxu0 %v384
        %v586 = vpop.f32.mrb[0].mxu0
        %v587 = vadd.f32 0.0, %v586
        %v588 = vpop.f32.mrb[0].mxu0
        %v589 = vpop.f32.mrb[0].mxu0
        %v590 = vadd.f32 0.0, %v589
        %v591 = vpop.f32.mrb[0].mxu0
        %592 = vmatprep.mubr.bf16.mxu0 %v387
        %593 = vmatmul.mubr.bf16.gmra.mrb[0].mxu0 %v386
        %v594 = vpop.f32.mrb[0].mxu0
        %v595 = vadd.f32 0.0, %v594
        %v596 = vpop.f32.mrb[0].mxu0
        %v597 = vpop.f32.mrb[0].mxu0
        %v598 = vadd.f32 0.0, %v597
        %v599 = vpop.f32.mrb[0].mxu0
        %600 = vmatprep.mubr.bf16.mxu0 %v389
        %601 = vmatmul.mubr.bf16.gmra.mrb[0].mxu0 %v388
        %v602 = vpop.f32.mrb[0].mxu0
        %v603 = vadd.f32 0.0, %v602
        %v604 = vpop.f32.mrb[0].mxu0
        %v605 = vpop.f32.mrb[0].mxu0
        %v606 = vadd.f32 0.0, %v605
        %v607 = vpop.f32.mrb[0].mxu0
        %608 = vmatprep.mubr.bf16.mxu0 %v391
        %609 = vmatmul.mubr.bf16.gmra.mrb[0].mxu0 %v390
        %v610 = vpop.f32.mrb[0].mxu0
        %v611 = vadd.f32 0.0, %v610
        %v612 = vpop.f32.mrb[0].mxu0
        %v613 = vpop.f32.mrb[0].mxu0
        %v614 = vadd.f32 0.0, %v613
        %v615 = vpop.f32.mrb[0].mxu0
        %616 = vdwg.mxu0
        %p617 = scmp.eq.s32.totalorder %s23, 0
        // Predicated region
        $region49: #{graphsage_forward.2} parent=43 // pred_check
          %p618 = pneg %p617
        $region50: #{graphsage_forward.2} parent=43 // pred_check_branch
          %620 = sbr.rel (%p618) target = $region52
        $region51: #{graphsage_forward.2} parent=43 // pred_region
          %621 = vst [vmem:[#allocation2] sm:$0xff] %v555
          %622 = vst [vmem:[#allocation2 + $0x8] sm:$0xff] %v558
          %623 = vst [vmem:[#allocation2 + $0x10] sm:$0xff] %v563
          %624 = vst [vmem:[#allocation2 + $0x18] sm:$0xff] %v566
          %625 = vst [vmem:[#allocation2 + $0x20] sm:$0xff] %v571
          %626 = vst [vmem:[#allocation2 + $0x28] sm:$0xff] %v574
          %627 = vst [vmem:[#allocation2 + $0x30] sm:$0xff] %v579
          %628 = vst [vmem:[#allocation2 + $0x38] sm:$0xff] %v582
          %629 = vst [vmem:[#allocation2 + $0x40] sm:$0xff] %v587
          %630 = vst [vmem:[#allocation2 + $0x48] sm:$0xff] %v590
          %631 = vst [vmem:[#allocation2 + $0x50] sm:$0xff] %v595
          %632 = vst [vmem:[#allocation2 + $0x58] sm:$0xff] %v598
          %633 = vst [vmem:[#allocation2 + $0x60] sm:$0xff] %v603
          %634 = vst [vmem:[#allocation2 + $0x68] sm:$0xff] %v606
          %635 = vst [vmem:[#allocation2 + $0x70] sm:$0xff] %v611
          %636 = vst [vmem:[#allocation2 + $0x78] sm:$0xff] %v614
          %v637 = vld [vmem:[%s353] sm:$0xf]
          %v638 = vld [vmem:[%s353 + $0x4] sm:$0xf]
          %v639 = vld [vmem:[%s353 + $0x8] sm:$0xf]
          %v640 = vld [vmem:[%s353 + $0xc] sm:$0xf]
          %v641 = vld [vmem:[%s353 + $0x10] sm:$0xf]
          %v642 = vld [vmem:[%s353 + $0x14] sm:$0xf]
          %v643 = vld [vmem:[%s353 + $0x18] sm:$0xf]
          %v644 = vld [vmem:[%s353 + $0x1c] sm:$0xf]
          %v645 = vld [vmem:[%s353 + $0x20] sm:$0xf]
          %v646 = vld [vmem:[%s353 + $0x24] sm:$0xf]
          %v647 = vld [vmem:[%s353 + $0x28] sm:$0xf]
          %v648 = vld [vmem:[%s353 + $0x2c] sm:$0xf]
          %v649 = vld [vmem:[%s353 + $0x30] sm:$0xf]
          %v650 = vld [vmem:[%s353 + $0x34] sm:$0xf]
          %v651 = vld [vmem:[%s353 + $0x38] sm:$0xf]
          %v652 = vld [vmem:[%s353 + $0x3c] sm:$0xf]
          %v653 = vld [vmem:[#allocation4] sm:$0xf]
          %v654 = vld [vmem:[#allocation4 + $0x4] sm:$0xf]
          %v655 = vld [vmem:[#allocation4 + $0x8] sm:$0xf]
          %v656 = vld [vmem:[#allocation4 + $0xc] sm:$0xf]
          %v657 = vld [vmem:[#allocation4 + $0x10] sm:$0xf]
          %v658 = vld [vmem:[#allocation4 + $0x14] sm:$0xf]
          %v659 = vld [vmem:[#allocation4 + $0x18] sm:$0xf]
          %v660 = vld [vmem:[#allocation4 + $0x1c] sm:$0xf]
          %v661 = vld [vmem:[#allocation4 + $0x20] sm:$0xf]
          %v662 = vld [vmem:[#allocation4 + $0x24] sm:$0xf]
          %v663 = vld [vmem:[#allocation4 + $0x28] sm:$0xf]
          %v664 = vld [vmem:[#allocation4 + $0x2c] sm:$0xf]
          %v665 = vld [vmem:[#allocation4 + $0x30] sm:$0xf]
          %v666 = vld [vmem:[#allocation4 + $0x34] sm:$0xf]
          %v667 = vld [vmem:[#allocation4 + $0x38] sm:$0xf]
          %v668 = vld [vmem:[#allocation4 + $0x3c] sm:$0xf]
          %v685 = vunpack.c.l.b16 %v637
          %v686 = vunpack.c.l.b16 %v638
          %v687 = vunpack.c.l.b16 %v639
          %v688 = vunpack.c.l.b16 %v640
          %v689 = vunpack.c.l.b16 %v641
          %v690 = vunpack.c.l.b16 %v642
          %v691 = vunpack.c.l.b16 %v643
          %v692 = vunpack.c.l.b16 %v644
          %v693 = vunpack.c.l.b16 %v645
          %v694 = vunpack.c.l.b16 %v646
          %v695 = vunpack.c.l.b16 %v647
          %v696 = vunpack.c.l.b16 %v648
          %v697 = vunpack.c.l.b16 %v649
          %v698 = vunpack.c.l.b16 %v650
          %v699 = vunpack.c.l.b16 %v651
          %v700 = vunpack.c.l.b16 %v652
          %v701 = vpack.c.b16 %v686, %v685
          %v702 = vpack.c.b16 %v688, %v687
          %v703 = vpack.c.b16 %v690, %v689
          %v704 = vpack.c.b16 %v692, %v691
          %v705 = vpack.c.b16 %v694, %v693
          %v706 = vpack.c.b16 %v696, %v695
          %v707 = vpack.c.b16 %v698, %v697
          %v708 = vpack.c.b16 %v700, %v699
          %v733 = vunpack.c.l.b16 %v653
          %v734 = vunpack.c.l.b16 %v654
          %v735 = vunpack.c.l.b16 %v655
          %v736 = vunpack.c.l.b16 %v656
          %v737 = vunpack.c.l.b16 %v657
          %v738 = vunpack.c.l.b16 %v658
          %v739 = vunpack.c.l.b16 %v659
          %v740 = vunpack.c.l.b16 %v660
          %v741 = vunpack.c.l.b16 %v661
          %v742 = vunpack.c.l.b16 %v662
          %v743 = vunpack.c.l.b16 %v663
          %v744 = vunpack.c.l.b16 %v664
          %v745 = vunpack.c.l.b16 %v665
          %v746 = vunpack.c.l.b16 %v666
          %v747 = vunpack.c.l.b16 %v667
          %v748 = vunpack.c.l.b16 %v668
          %v749 = vpack.c.b16 %v734, %v733
          %v750 = vpack.c.b16 %v736, %v735
          %v751 = vpack.c.b16 %v738, %v737
          %v752 = vpack.c.b16 %v740, %v739
          %v753 = vpack.c.b16 %v742, %v741
          %v754 = vpack.c.b16 %v744, %v743
          %v755 = vpack.c.b16 %v746, %v745
          %v756 = vpack.c.b16 %v748, %v747
          %765 = vmatprep.subr.bf16.mxu0 0
          %766 = vmatpush1.bf16.msra.mxu0 %v749
          %767 = vmatprep.subr.bf16.mxu0 0
          %768 = vmatpush1.bf16.msra.mxu0 %v750
          %769 = vmatprep.subr.bf16.mxu0 0
          %770 = vmatpush1.bf16.msra.mxu0 %v751
          %771 = vmatprep.subr.bf16.mxu0 0
          %772 = vmatpush1.bf16.msra.mxu0 %v752
          %773 = vmatprep.subr.bf16.mxu0 0
          %774 = vmatpush1.bf16.msra.mxu0 %v753
          %775 = vmatprep.subr.bf16.mxu0 0
          %776 = vmatpush1.bf16.msra.mxu0 %v754
          %777 = vmatprep.subr.bf16.mxu0 0
          %778 = vmatpush1.bf16.msra.mxu0 %v755
          %779 = vmatprep.subr.bf16.mxu0 0
          %780 = vmatpush1.bf16.msra.mxu0 %v756
          %781 = vmatprep.subr.bf16.mxu0 0
          %782 = vmatpush1.bf16.msra.mxu0 0
          %783 = vmatprep.subr.bf16.mxu0 0
          %784 = vmatpush1.bf16.msra.mxu0 0
          %785 = vmatprep.subr.bf16.mxu0 0
          %786 = vmatpush1.bf16.msra.mxu0 0
          %787 = vmatprep.subr.bf16.mxu0 0
          %788 = vmatpush1.bf16.msra.mxu0 0
          %789 = vmatprep.subr.bf16.mxu0 0
          %790 = vmatpush1.bf16.msra.mxu0 0
          %791 = vmatprep.subr.bf16.mxu0 0
          %792 = vmatpush1.bf16.msra.mxu0 0
          %793 = vmatprep.subr.bf16.mxu0 0
          %794 = vmatpush1.bf16.msra.mxu0 0
          %795 = vmatprep.subr.bf16.mxu0 0
          %796 = vmatpush1.bf16.msra.mxu0 0
          %797 = vmatprep.mubr.bf16.mxu0 0
          %798 = vmatmul.mubr.bf16.gmra.mrb[0].mxu0 %v701
          %v799 = vpop.f32.mrb[0].mxu0
          %v800 = vadd.f32 0.0, %v799
          %v801 = vpop.f32.mrb[0].mxu0
          %v802 = vpop.f32.mrb[0].mxu0
          %v803 = vadd.f32 0.0, %v802
          %v804 = vpop.f32.mrb[0].mxu0
          %805 = vmatprep.mubr.bf16.mxu0 0
          %806 = vmatmul.mubr.bf16.gmra.mrb[0].mxu0 %v702
          %v807 = vpop.f32.mrb[0].mxu0
          %v808 = vadd.f32 0.0, %v807
          %v809 = vpop.f32.mrb[0].mxu0
          %v810 = vpop.f32.mrb[0].mxu0
          %v811 = vadd.f32 0.0, %v810
          %v812 = vpop.f32.mrb[0].mxu0
          %813 = vmatprep.mubr.bf16.mxu0 0
          %814 = vmatmul.mubr.bf16.gmra.mrb[0].mxu0 %v703
          %v815 = vpop.f32.mrb[0].mxu0
          %v816 = vadd.f32 0.0, %v815
          %v817 = vpop.f32.mrb[0].mxu0
          %v818 = vpop.f32.mrb[0].mxu0
          %v819 = vadd.f32 0.0, %v818
          %v820 = vpop.f32.mrb[0].mxu0
          %821 = vmatprep.mubr.bf16.mxu0 0
          %822 = vmatmul.mubr.bf16.gmra.mrb[0].mxu0 %v704
          %v823 = vpop.f32.mrb[0].mxu0
          %v824 = vadd.f32 0.0, %v823
          %v825 = vpop.f32.mrb[0].mxu0
          %v826 = vpop.f32.mrb[0].mxu0
          %v827 = vadd.f32 0.0, %v826
          %v828 = vpop.f32.mrb[0].mxu0
          %829 = vmatprep.mubr.bf16.mxu0 0
          %830 = vmatmul.mubr.bf16.gmra.mrb[0].mxu0 %v705
          %v831 = vpop.f32.mrb[0].mxu0
          %v832 = vadd.f32 0.0, %v831
          %v833 = vpop.f32.mrb[0].mxu0
          %v834 = vpop.f32.mrb[0].mxu0
          %v835 = vadd.f32 0.0, %v834
          %v836 = vpop.f32.mrb[0].mxu0
          %837 = vmatprep.mubr.bf16.mxu0 0
          %838 = vmatmul.mubr.bf16.gmra.mrb[0].mxu0 %v706
          %v839 = vpop.f32.mrb[0].mxu0
          %v840 = vadd.f32 0.0, %v839
          %v841 = vpop.f32.mrb[0].mxu0
          %v842 = vpop.f32.mrb[0].mxu0
          %v843 = vadd.f32 0.0, %v842
          %v844 = vpop.f32.mrb[0].mxu0
          %845 = vmatprep.mubr.bf16.mxu0 0
          %846 = vmatmul.mubr.bf16.gmra.mrb[0].mxu0 %v707
          %v847 = vpop.f32.mrb[0].mxu0
          %v848 = vadd.f32 0.0, %v847
          %v849 = vpop.f32.mrb[0].mxu0
          %v850 = vpop.f32.mrb[0].mxu0
          %v851 = vadd.f32 0.0, %v850
          %v852 = vpop.f32.mrb[0].mxu0
          %853 = vmatprep.mubr.bf16.mxu0 0
          %854 = vmatmul.mubr.bf16.gmra.mrb[0].mxu0 %v708
          %v855 = vpop.f32.mrb[0].mxu0
          %v856 = vadd.f32 0.0, %v855
          %v857 = vpop.f32.mrb[0].mxu0
          %v858 = vpop.f32.mrb[0].mxu0
          %v859 = vadd.f32 0.0, %v858
          %v860 = vpop.f32.mrb[0].mxu0
          %861 = vdwg.mxu0
          %862 = vst [vmem:[#allocation3] sm:$0xff] %v800
          %863 = vst [vmem:[#allocation3 + $0x8] sm:$0xff] %v803
          %864 = vst [vmem:[#allocation3 + $0x10] sm:$0xff] %v808
          %865 = vst [vmem:[#allocation3 + $0x18] sm:$0xff] %v811
          %866 = vst [vmem:[#allocation3 + $0x20] sm:$0xff] %v816
          %867 = vst [vmem:[#allocation3 + $0x28] sm:$0xff] %v819
          %868 = vst [vmem:[#allocation3 + $0x30] sm:$0xff] %v824
          %869 = vst [vmem:[#allocation3 + $0x38] sm:$0xff] %v827
          %870 = vst [vmem:[#allocation3 + $0x40] sm:$0xff] %v832
          %871 = vst [vmem:[#allocation3 + $0x48] sm:$0xff] %v835
          %872 = vst [vmem:[#allocation3 + $0x50] sm:$0xff] %v840
          %873 = vst [vmem:[#allocation3 + $0x58] sm:$0xff] %v843
          %874 = vst [vmem:[#allocation3 + $0x60] sm:$0xff] %v848
          %875 = vst [vmem:[#allocation3 + $0x68] sm:$0xff] %v851
          %876 = vst [vmem:[#allocation3 + $0x70] sm:$0xff] %v856
          %877 = vst [vmem:[#allocation3 + $0x78] sm:$0xff] %v859
        $region52: #{graphsage_forward.2} parent=43 // pred_fallthru
          _
        %p878 = scmp.gt.s32.totalorder %s23, 0
        // Predicated region
        $region53: #{graphsage_forward.2} parent=43 // pred_check
          %p879 = pneg %p878
        $region54: #{graphsage_forward.2} parent=43 // pred_check_branch
          %881 = sbr.rel (%p879) target = $region56
        $region55: #{graphsage_forward.2} parent=43 // pred_region
          %v882 = vld [vmem:[#allocation2] sm:$0xff]
          %v883 = vld [vmem:[#allocation2 + $0x8] sm:$0xff]
          %v884 = vld [vmem:[#allocation2 + $0x10] sm:$0xff]
          %v885 = vld [vmem:[#allocation2 + $0x18] sm:$0xff]
          %v886 = vld [vmem:[#allocation2 + $0x20] sm:$0xff]
          %v887 = vld [vmem:[#allocation2 + $0x28] sm:$0xff]
          %v888 = vld [vmem:[#allocation2 + $0x30] sm:$0xff]
          %v889 = vld [vmem:[#allocation2 + $0x38] sm:$0xff]
          %v890 = vld [vmem:[#allocation2 + $0x40] sm:$0xff]
          %v891 = vld [vmem:[#allocation2 + $0x48] sm:$0xff]
          %v892 = vld [vmem:[#allocation2 + $0x50] sm:$0xff]
          %v893 = vld [vmem:[#allocation2 + $0x58] sm:$0xff]
          %v894 = vld [vmem:[#allocation2 + $0x60] sm:$0xff]
          %v895 = vld [vmem:[#allocation2 + $0x68] sm:$0xff]
          %v896 = vld [vmem:[#allocation2 + $0x70] sm:$0xff]
          %v897 = vld [vmem:[#allocation2 + $0x78] sm:$0xff]
          %v898 = vadd.f32 %v882, %v555
          %v899 = vadd.f32 %v883, %v558
          %v900 = vadd.f32 %v884, %v563
          %v901 = vadd.f32 %v885, %v566
          %v902 = vadd.f32 %v886, %v571
          %v903 = vadd.f32 %v887, %v574
          %v904 = vadd.f32 %v888, %v579
          %v905 = vadd.f32 %v889, %v582
          %v906 = vadd.f32 %v890, %v587
          %v907 = vadd.f32 %v891, %v590
          %v908 = vadd.f32 %v892, %v595
          %v909 = vadd.f32 %v893, %v598
          %v910 = vadd.f32 %v894, %v603
          %v911 = vadd.f32 %v895, %v606
          %v912 = vadd.f32 %v896, %v611
          %v913 = vadd.f32 %v897, %v614
          %914 = vst [vmem:[#allocation2] sm:$0xff] %v898
          %915 = vst [vmem:[#allocation2 + $0x8] sm:$0xff] %v899
          %916 = vst [vmem:[#allocation2 + $0x10] sm:$0xff] %v900
          %917 = vst [vmem:[#allocation2 + $0x18] sm:$0xff] %v901
          %918 = vst [vmem:[#allocation2 + $0x20] sm:$0xff] %v902
          %919 = vst [vmem:[#allocation2 + $0x28] sm:$0xff] %v903
          %920 = vst [vmem:[#allocation2 + $0x30] sm:$0xff] %v904
          %921 = vst [vmem:[#allocation2 + $0x38] sm:$0xff] %v905
          %922 = vst [vmem:[#allocation2 + $0x40] sm:$0xff] %v906
          %923 = vst [vmem:[#allocation2 + $0x48] sm:$0xff] %v907
          %924 = vst [vmem:[#allocation2 + $0x50] sm:$0xff] %v908
          %925 = vst [vmem:[#allocation2 + $0x58] sm:$0xff] %v909
          %926 = vst [vmem:[#allocation2 + $0x60] sm:$0xff] %v910
          %927 = vst [vmem:[#allocation2 + $0x68] sm:$0xff] %v911
          %928 = vst [vmem:[#allocation2 + $0x70] sm:$0xff] %v912
          %929 = vst [vmem:[#allocation2 + $0x78] sm:$0xff] %v913
        $region56: #{graphsage_forward.2} parent=43 // pred_fallthru
          _
        // Predicated region
        $region57: #{graphsage_forward.2} parent=43 // pred_check
          %p930 = pneg %p617
        $region58: #{graphsage_forward.2} parent=43 // pred_check_branch
          %932 = sbr.rel (%p930) target = $region60
        $region59: #{graphsage_forward.2} parent=43 // pred_region
          %v933 = vld [vmem:[#allocation2] sm:$0xff]
          %v934 = vld [vmem:[#allocation2 + $0x8] sm:$0xff]
          %v935 = vld [vmem:[#allocation2 + $0x10] sm:$0xff]
          %v936 = vld [vmem:[#allocation2 + $0x18] sm:$0xff]
          %v937 = vld [vmem:[#allocation2 + $0x20] sm:$0xff]
          %v938 = vld [vmem:[#allocation2 + $0x28] sm:$0xff]
          %v939 = vld [vmem:[#allocation2 + $0x30] sm:$0xff]
          %v940 = vld [vmem:[#allocation2 + $0x38] sm:$0xff]
          %v941 = vld [vmem:[#allocation2 + $0x40] sm:$0xff]
          %v942 = vld [vmem:[#allocation2 + $0x48] sm:$0xff]
          %v943 = vld [vmem:[#allocation2 + $0x50] sm:$0xff]
          %v944 = vld [vmem:[#allocation2 + $0x58] sm:$0xff]
          %v945 = vld [vmem:[#allocation2 + $0x60] sm:$0xff]
          %v946 = vld [vmem:[#allocation2 + $0x68] sm:$0xff]
          %v947 = vld [vmem:[#allocation2 + $0x70] sm:$0xff]
          %v948 = vld [vmem:[#allocation2 + $0x78] sm:$0xff]
          %v949 = vld [vmem:[%s359] sm:$0xff]
          %v950 = vld [vmem:[%s359 + $0x8] sm:$0xff]
          %v951 = vld [vmem:[%s359 + $0x10] sm:$0xff]
          %v952 = vld [vmem:[%s359 + $0x18] sm:$0xff]
          %v953 = vld [vmem:[%s359 + $0x20] sm:$0xff]
          %v954 = vld [vmem:[%s359 + $0x28] sm:$0xff]
          %v955 = vld [vmem:[%s359 + $0x30] sm:$0xff]
          %v956 = vld [vmem:[%s359 + $0x38] sm:$0xff]
          %v957 = vld [vmem:[%s359 + $0x40] sm:$0xff]
          %v958 = vld [vmem:[%s359 + $0x48] sm:$0xff]
          %v959 = vld [vmem:[%s359 + $0x50] sm:$0xff]
          %v960 = vld [vmem:[%s359 + $0x58] sm:$0xff]
          %v961 = vld [vmem:[%s359 + $0x60] sm:$0xff]
          %v962 = vld [vmem:[%s359 + $0x68] sm:$0xff]
          %v963 = vld [vmem:[%s359 + $0x70] sm:$0xff]
          %v964 = vld [vmem:[%s359 + $0x78] sm:$0xff]
          %966 = vset.pattern.permute.xlu0 0
          %967 = vperm.xlu0 %966, %v949
          %v968 = vpop.permute.xlu0 %967
          %971 = vset.pattern.permute.xlu0 0
          %972 = vperm.xlu0 %971, %v950
          %v973 = vpop.permute.xlu0 %972
          %976 = vset.pattern.permute.xlu0 0
          %977 = vperm.xlu0 %976, %v951
          %v978 = vpop.permute.xlu0 %977
          %981 = vset.pattern.permute.xlu0 0
          %982 = vperm.xlu0 %981, %v952
          %v983 = vpop.permute.xlu0 %982
          %986 = vset.pattern.permute.xlu0 0
          %987 = vperm.xlu0 %986, %v953
          %v988 = vpop.permute.xlu0 %987
          %991 = vset.pattern.permute.xlu0 0
          %992 = vperm.xlu0 %991, %v954
          %v993 = vpop.permute.xlu0 %992
          %996 = vset.pattern.permute.xlu0 0
          %997 = vperm.xlu0 %996, %v955
          %v998 = vpop.permute.xlu0 %997
          %1001 = vset.pattern.permute.xlu0 0
          %1002 = vperm.xlu0 %1001, %v956
          %v1003 = vpop.permute.xlu0 %1002
          %1006 = vset.pattern.permute.xlu0 0
          %1007 = vperm.xlu0 %1006, %v957
          %v1008 = vpop.permute.xlu0 %1007
          %1011 = vset.pattern.permute.xlu0 0
          %1012 = vperm.xlu0 %1011, %v958
          %v1013 = vpop.permute.xlu0 %1012
          %1016 = vset.pattern.permute.xlu0 0
          %1017 = vperm.xlu0 %1016, %v959
          %v1018 = vpop.permute.xlu0 %1017
          %1021 = vset.pattern.permute.xlu0 0
          %1022 = vperm.xlu0 %1021, %v960
          %v1023 = vpop.permute.xlu0 %1022
          %1026 = vset.pattern.permute.xlu0 0
          %1027 = vperm.xlu0 %1026, %v961
          %v1028 = vpop.permute.xlu0 %1027
          %1031 = vset.pattern.permute.xlu0 0
          %1032 = vperm.xlu0 %1031, %v962
          %v1033 = vpop.permute.xlu0 %1032
          %1036 = vset.pattern.permute.xlu0 0
          %1037 = vperm.xlu0 %1036, %v963
          %v1038 = vpop.permute.xlu0 %1037
          %1041 = vset.pattern.permute.xlu0 0
          %1042 = vperm.xlu0 %1041, %v964
          %v1043 = vpop.permute.xlu0 %1042
          %v1045 = vmul.f32 %v933, %v968
          %v1046 = vmul.f32 %v934, %v973
          %v1047 = vmul.f32 %v935, %v978
          %v1048 = vmul.f32 %v936, %v983
          %v1049 = vmul.f32 %v937, %v988
          %v1050 = vmul.f32 %v938, %v993
          %v1051 = vmul.f32 %v939, %v998
          %v1052 = vmul.f32 %v940, %v1003
          %v1053 = vmul.f32 %v941, %v1008
          %v1054 = vmul.f32 %v942, %v1013
          %v1055 = vmul.f32 %v943, %v1018
          %v1056 = vmul.f32 %v944, %v1023
          %v1057 = vmul.f32 %v945, %v1028
          %v1058 = vmul.f32 %v946, %v1033
          %v1059 = vmul.f32 %v947, %v1038
          %v1060 = vmul.f32 %v948, %v1043
          %v1061 = vpack.c.bf16 %v1046, %v1045
          %v1062 = vpack.c.bf16 %v1048, %v1047
          %v1063 = vpack.c.bf16 %v1050, %v1049
          %v1064 = vpack.c.bf16 %v1052, %v1051
          %v1065 = vpack.c.bf16 %v1054, %v1053
          %v1066 = vpack.c.bf16 %v1056, %v1055
          %v1067 = vpack.c.bf16 %v1058, %v1057
          %v1068 = vpack.c.bf16 %v1060, %v1059
          %v1069 = vld [vmem:[#allocation3] sm:$0xff]
          %v1070 = vld [vmem:[#allocation3 + $0x8] sm:$0xff]
          %v1071 = vld [vmem:[#allocation3 + $0x10] sm:$0xff]
          %v1072 = vld [vmem:[#allocation3 + $0x18] sm:$0xff]
          %v1073 = vld [vmem:[#allocation3 + $0x20] sm:$0xff]
          %v1074 = vld [vmem:[#allocation3 + $0x28] sm:$0xff]
          %v1075 = vld [vmem:[#allocation3 + $0x30] sm:$0xff]
          %v1076 = vld [vmem:[#allocation3 + $0x38] sm:$0xff]
          %v1077 = vld [vmem:[#allocation3 + $0x40] sm:$0xff]
          %v1078 = vld [vmem:[#allocation3 + $0x48] sm:$0xff]
          %v1079 = vld [vmem:[#allocation3 + $0x50] sm:$0xff]
          %v1080 = vld [vmem:[#allocation3 + $0x58] sm:$0xff]
          %v1081 = vld [vmem:[#allocation3 + $0x60] sm:$0xff]
          %v1082 = vld [vmem:[#allocation3 + $0x68] sm:$0xff]
          %v1083 = vld [vmem:[#allocation3 + $0x70] sm:$0xff]
          %v1084 = vld [vmem:[#allocation3 + $0x78] sm:$0xff]
          %v1085 = vld [vmem:[#allocation4 + $0x40] sm:$0xf]
          %v1086 = vld [vmem:[#allocation4 + $0x44] sm:$0xf]
          %v1087 = vld [vmem:[#allocation4 + $0x48] sm:$0xf]
          %v1088 = vld [vmem:[#allocation4 + $0x4c] sm:$0xf]
          %v1089 = vld [vmem:[#allocation4 + $0x50] sm:$0xf]
          %v1090 = vld [vmem:[#allocation4 + $0x54] sm:$0xf]
          %v1091 = vld [vmem:[#allocation4 + $0x58] sm:$0xf]
          %v1092 = vld [vmem:[#allocation4 + $0x5c] sm:$0xf]
          %v1093 = vld [vmem:[#allocation4 + $0x60] sm:$0xf]
          %v1094 = vld [vmem:[#allocation4 + $0x64] sm:$0xf]
          %v1095 = vld [vmem:[#allocation4 + $0x68] sm:$0xf]
          %v1096 = vld [vmem:[#allocation4 + $0x6c] sm:$0xf]
          %v1097 = vld [vmem:[#allocation4 + $0x70] sm:$0xf]
          %v1098 = vld [vmem:[#allocation4 + $0x74] sm:$0xf]
          %v1099 = vld [vmem:[#allocation4 + $0x78] sm:$0xf]
          %v1100 = vld [vmem:[#allocation4 + $0x7c] sm:$0xf]
          %v1117 = vunpack.c.l.b16 %v1085
          %v1118 = vunpack.c.l.b16 %v1086
          %v1119 = vunpack.c.l.b16 %v1087
          %v1120 = vunpack.c.l.b16 %v1088
          %v1121 = vunpack.c.l.b16 %v1089
          %v1122 = vunpack.c.l.b16 %v1090
          %v1123 = vunpack.c.l.b16 %v1091
          %v1124 = vunpack.c.l.b16 %v1092
          %v1125 = vunpack.c.l.b16 %v1093
          %v1126 = vunpack.c.l.b16 %v1094
          %v1127 = vunpack.c.l.b16 %v1095
          %v1128 = vunpack.c.l.b16 %v1096
          %v1129 = vunpack.c.l.b16 %v1097
          %v1130 = vunpack.c.l.b16 %v1098
          %v1131 = vunpack.c.l.b16 %v1099
          %v1132 = vunpack.c.l.b16 %v1100
          %v1133 = vpack.c.b16 %v1118, %v1117
          %v1134 = vpack.c.b16 %v1120, %v1119
          %v1135 = vpack.c.b16 %v1122, %v1121
          %v1136 = vpack.c.b16 %v1124, %v1123
          %v1137 = vpack.c.b16 %v1126, %v1125
          %v1138 = vpack.c.b16 %v1128, %v1127
          %v1139 = vpack.c.b16 %v1130, %v1129
          %v1140 = vpack.c.b16 %v1132, %v1131
          %1149 = vmatprep.subr.bf16.mxu0 0
          %1150 = vmatpush1.bf16.msra.mxu0 %v1133
          %1151 = vmatprep.subr.bf16.mxu0 0
          %1152 = vmatpush1.bf16.msra.mxu0 %v1134
          %1153 = vmatprep.subr.bf16.mxu0 0
          %1154 = vmatpush1.bf16.msra.mxu0 %v1135
          %1155 = vmatprep.subr.bf16.mxu0 0
          %1156 = vmatpush1.bf16.msra.mxu0 %v1136
          %1157 = vmatprep.subr.bf16.mxu0 0
          %1158 = vmatpush1.bf16.msra.mxu0 %v1137
          %1159 = vmatprep.subr.bf16.mxu0 0
          %1160 = vmatpush1.bf16.msra.mxu0 %v1138
          %1161 = vmatprep.subr.bf16.mxu0 0
          %1162 = vmatpush1.bf16.msra.mxu0 %v1139
          %1163 = vmatprep.subr.bf16.mxu0 0
          %1164 = vmatpush1.bf16.msra.mxu0 %v1140
          %1165 = vmatprep.subr.bf16.mxu0 0
          %1166 = vmatpush1.bf16.msra.mxu0 0
          %1167 = vmatprep.subr.bf16.mxu0 0
          %1168 = vmatpush1.bf16.msra.mxu0 0
          %1169 = vmatprep.subr.bf16.mxu0 0
          %1170 = vmatpush1.bf16.msra.mxu0 0
          %1171 = vmatprep.subr.bf16.mxu0 0
          %1172 = vmatpush1.bf16.msra.mxu0 0
          %1173 = vmatprep.subr.bf16.mxu0 0
          %1174 = vmatpush1.bf16.msra.mxu0 0
          %1175 = vmatprep.subr.bf16.mxu0 0
          %1176 = vmatpush1.bf16.msra.mxu0 0
          %1177 = vmatprep.subr.bf16.mxu0 0
          %1178 = vmatpush1.bf16.msra.mxu0 0
          %1179 = vmatprep.subr.bf16.mxu0 0
          %1180 = vmatpush1.bf16.msra.mxu0 0
          %1181 = vmatprep.mubr.bf16.mxu0 0
          %1182 = vmatmul.mubr.bf16.gmra.mrb[0].mxu0 %v1061
          %v1183 = vpop.f32.mrb[0].mxu0
          %v1184 = vadd.f32 0.0, %v1183
          %v1185 = vpop.f32.mrb[0].mxu0
          %v1186 = vpop.f32.mrb[0].mxu0
          %v1187 = vadd.f32 0.0, %v1186
          %v1188 = vpop.f32.mrb[0].mxu0
          %1189 = vmatprep.mubr.bf16.mxu0 0
          %1190 = vmatmul.mubr.bf16.gmra.mrb[0].mxu0 %v1062
          %v1191 = vpop.f32.mrb[0].mxu0
          %v1192 = vadd.f32 0.0, %v1191
          %v1193 = vpop.f32.mrb[0].mxu0
          %v1194 = vpop.f32.mrb[0].mxu0
          %v1195 = vadd.f32 0.0, %v1194
          %v1196 = vpop.f32.mrb[0].mxu0
          %1197 = vmatprep.mubr.bf16.mxu0 0
          %1198 = vmatmul.mubr.bf16.gmra.mrb[0].mxu0 %v1063
          %v1199 = vpop.f32.mrb[0].mxu0
          %v1200 = vadd.f32 0.0, %v1199
          %v1201 = vpop.f32.mrb[0].mxu0
          %v1202 = vpop.f32.mrb[0].mxu0
          %v1203 = vadd.f32 0.0, %v1202
          %v1204 = vpop.f32.mrb[0].mxu0
          %1205 = vmatprep.mubr.bf16.mxu0 0
          %1206 = vmatmul.mubr.bf16.gmra.mrb[0].mxu0 %v1064
          %v1207 = vpop.f32.mrb[0].mxu0
          %v1208 = vadd.f32 0.0, %v1207
          %v1209 = vpop.f32.mrb[0].mxu0
          %v1210 = vpop.f32.mrb[0].mxu0
          %v1211 = vadd.f32 0.0, %v1210
          %v1212 = vpop.f32.mrb[0].mxu0
          %1213 = vmatprep.mubr.bf16.mxu0 0
          %1214 = vmatmul.mubr.bf16.gmra.mrb[0].mxu0 %v1065
          %v1215 = vpop.f32.mrb[0].mxu0
          %v1216 = vadd.f32 0.0, %v1215
          %v1217 = vpop.f32.mrb[0].mxu0
          %v1218 = vpop.f32.mrb[0].mxu0
          %v1219 = vadd.f32 0.0, %v1218
          %v1220 = vpop.f32.mrb[0].mxu0
          %1221 = vmatprep.mubr.bf16.mxu0 0
          %1222 = vmatmul.mubr.bf16.gmra.mrb[0].mxu0 %v1066
          %v1223 = vpop.f32.mrb[0].mxu0
          %v1224 = vadd.f32 0.0, %v1223
          %v1225 = vpop.f32.mrb[0].mxu0
          %v1226 = vpop.f32.mrb[0].mxu0
          %v1227 = vadd.f32 0.0, %v1226
          %v1228 = vpop.f32.mrb[0].mxu0
          %1229 = vmatprep.mubr.bf16.mxu0 0
          %1230 = vmatmul.mubr.bf16.gmra.mrb[0].mxu0 %v1067
          %v1231 = vpop.f32.mrb[0].mxu0
          %v1232 = vadd.f32 0.0, %v1231
          %v1233 = vpop.f32.mrb[0].mxu0
          %v1234 = vpop.f32.mrb[0].mxu0
          %v1235 = vadd.f32 0.0, %v1234
          %v1236 = vpop.f32.mrb[0].mxu0
          %1237 = vmatprep.mubr.bf16.mxu0 0
          %1238 = vmatmul.mubr.bf16.gmra.mrb[0].mxu0 %v1068
          %v1239 = vpop.f32.mrb[0].mxu0
          %v1240 = vadd.f32 0.0, %v1239
          %v1241 = vpop.f32.mrb[0].mxu0
          %v1242 = vpop.f32.mrb[0].mxu0
          %v1243 = vadd.f32 0.0, %v1242
          %v1244 = vpop.f32.mrb[0].mxu0
          %1245 = vdwg.mxu0
          %v1246 = vadd.f32 %v1069, %v1184
          %v1247 = vadd.f32 %v1070, %v1187
          %v1248 = vadd.f32 %v1071, %v1192
          %v1249 = vadd.f32 %v1072, %v1195
          %v1250 = vadd.f32 %v1073, %v1200
          %v1251 = vadd.f32 %v1074, %v1203
          %v1252 = vadd.f32 %v1075, %v1208
          %v1253 = vadd.f32 %v1076, %v1211
          %v1254 = vadd.f32 %v1077, %v1216
          %v1255 = vadd.f32 %v1078, %v1219
          %v1256 = vadd.f32 %v1079, %v1224
          %v1257 = vadd.f32 %v1080, %v1227
          %v1258 = vadd.f32 %v1081, %v1232
          %v1259 = vadd.f32 %v1082, %v1235
          %v1260 = vadd.f32 %v1083, %v1240
          %v1261 = vadd.f32 %v1084, %v1243
          %v1262 = vld [vmem:[%s5] sm:$0x1]
          %v1264 = vlaneseq
          %v1265 = vshrl.u32 %v1264, 7
          %v1266 = vsub.s32 0, %v1265
          %v1267 = vrot.slane %v1262, %v1266
          %v1269 = vadd.f32 %v1246, %v1267
          %v1270 = vadd.f32 %v1247, %v1267
          %v1271 = vadd.f32 %v1248, %v1267
          %v1272 = vadd.f32 %v1249, %v1267
          %v1273 = vadd.f32 %v1250, %v1267
          %v1274 = vadd.f32 %v1251, %v1267
          %v1275 = vadd.f32 %v1252, %v1267
          %v1276 = vadd.f32 %v1253, %v1267
          %v1277 = vadd.f32 %v1254, %v1267
          %v1278 = vadd.f32 %v1255, %v1267
          %v1279 = vadd.f32 %v1256, %v1267
          %v1280 = vadd.f32 %v1257, %v1267
          %v1281 = vadd.f32 %v1258, %v1267
          %v1282 = vadd.f32 %v1259, %v1267
          %v1283 = vadd.f32 %v1260, %v1267
          %v1284 = vadd.f32 %v1261, %v1267
          %v1285 = vmax.f32 %v1269, 0.0
          %v1286 = vmax.f32 %v1270, 0.0
          %v1287 = vmax.f32 %v1271, 0.0
          %v1288 = vmax.f32 %v1272, 0.0
          %v1289 = vmax.f32 %v1273, 0.0
          %v1290 = vmax.f32 %v1274, 0.0
          %v1291 = vmax.f32 %v1275, 0.0
          %v1292 = vmax.f32 %v1276, 0.0
          %v1293 = vmax.f32 %v1277, 0.0
          %v1294 = vmax.f32 %v1278, 0.0
          %v1295 = vmax.f32 %v1279, 0.0
          %v1296 = vmax.f32 %v1280, 0.0
          %v1297 = vmax.f32 %v1281, 0.0
          %v1298 = vmax.f32 %v1282, 0.0
          %v1299 = vmax.f32 %v1283, 0.0
          %v1300 = vmax.f32 %v1284, 0.0
          %v1301 = vpack.c.bf16 %v1286, %v1285
          %v1302 = vpack.c.bf16 %v1288, %v1287
          %v1303 = vpack.c.bf16 %v1290, %v1289
          %v1304 = vpack.c.bf16 %v1292, %v1291
          %v1305 = vpack.c.bf16 %v1294, %v1293
          %v1306 = vpack.c.bf16 %v1296, %v1295
          %v1307 = vpack.c.bf16 %v1298, %v1297
          %v1308 = vpack.c.bf16 %v1300, %v1299
          %v1317 = vunpack.c.l.b16 %v1301
          %v1318 = vunpack.c.h.b16 %v1301
          %v1319 = vunpack.c.l.b16 %v1302
          %v1320 = vunpack.c.h.b16 %v1302
          %v1321 = vunpack.c.l.b16 %v1303
          %v1322 = vunpack.c.h.b16 %v1303
          %v1323 = vunpack.c.l.b16 %v1304
          %v1324 = vunpack.c.h.b16 %v1304
          %v1325 = vunpack.c.l.b16 %v1305
          %v1326 = vunpack.c.h.b16 %v1305
          %v1327 = vunpack.c.l.b16 %v1306
          %v1328 = vunpack.c.h.b16 %v1306
          %v1329 = vunpack.c.l.b16 %v1307
          %v1330 = vunpack.c.h.b16 %v1307
          %v1331 = vunpack.c.l.b16 %v1308
          %v1332 = vunpack.c.h.b16 %v1308
          %v1333 = vpack.c.b16 %v1317, %v1317
          %v1334 = vpack.c.b16 %v1318, %v1318
          %v1335 = vpack.c.b16 %v1319, %v1319
          %v1336 = vpack.c.b16 %v1320, %v1320
          %v1337 = vpack.c.b16 %v1321, %v1321
          %v1338 = vpack.c.b16 %v1322, %v1322
          %v1339 = vpack.c.b16 %v1323, %v1323
          %v1340 = vpack.c.b16 %v1324, %v1324
          %v1341 = vpack.c.b16 %v1325, %v1325
          %v1342 = vpack.c.b16 %v1326, %v1326
          %v1343 = vpack.c.b16 %v1327, %v1327
          %v1344 = vpack.c.b16 %v1328, %v1328
          %v1345 = vpack.c.b16 %v1329, %v1329
          %v1346 = vpack.c.b16 %v1330, %v1330
          %v1347 = vpack.c.b16 %v1331, %v1331
          %v1348 = vpack.c.b16 %v1332, %v1332
          %1365 = vst [vmem:[%s365] sm:$0xf] %v1333
          %1366 = vst [vmem:[%s365 + $0x4] sm:$0xf] %v1334
          %1367 = vst [vmem:[%s365 + $0x8] sm:$0xf] %v1335
          %1368 = vst [vmem:[%s365 + $0xc] sm:$0xf] %v1336
          %1369 = vst [vmem:[%s365 + $0x10] sm:$0xf] %v1337
          %1370 = vst [vmem:[%s365 + $0x14] sm:$0xf] %v1338
          %1371 = vst [vmem:[%s365 + $0x18] sm:$0xf] %v1339
          %1372 = vst [vmem:[%s365 + $0x1c] sm:$0xf] %v1340
          %1373 = vst [vmem:[%s365 + $0x20] sm:$0xf] %v1341
          %1374 = vst [vmem:[%s365 + $0x24] sm:$0xf] %v1342
          %1375 = vst [vmem:[%s365 + $0x28] sm:$0xf] %v1343
          %1376 = vst [vmem:[%s365 + $0x2c] sm:$0xf] %v1344
          %1377 = vst [vmem:[%s365 + $0x30] sm:$0xf] %v1345
          %1378 = vst [vmem:[%s365 + $0x34] sm:$0xf] %v1346
          %1379 = vst [vmem:[%s365 + $0x38] sm:$0xf] %v1347
          %1380 = vst [vmem:[%s365 + $0x3c] sm:$0xf] %v1348
        $region60: #{graphsage_forward.2} parent=43 // pred_fallthru
          _
        %s1381 = smul.u32 16, %s22
        %p1382 = scmp.lt.s32.totalorder %s1381, 31
        %s1383 = scalar_select %p1382, %s1381, 31
        %s1384 = smul.addr %s1383, 4
        %s1385 = scalar_lea.vmem %s6, %s1384
        // Predicated region
        $region61: #{graphsage_forward.2} parent=43 // pred_check
          %p1386 = pneg %p196
        $region62: #{graphsage_forward.2} parent=43 // pred_check_branch
          %1388 = sbr.rel (%p1386) target = $region64
        $region63: #{graphsage_forward.2} parent=43 // pred_region
          %s1389 = smul.u32 16, %s22
        $region64: #{graphsage_forward.2} parent=43 // pred_fallthru
          _
      $region44: #{graphsage_forward.2} parent=5 // pred_fallthru
        _
      %p1390 = scmp.le.s32.totalorder 2, %s13
      // Predicated region
      $region65: #{graphsage_forward.2} parent=5 // pred_check
        %p1391 = pneg %p1390
      $region66: #{graphsage_forward.2} parent=5 // pred_check_branch
        %1393 = sbr.rel (%p1391) target = $region68
      $region67: #{graphsage_forward.2} parent=5 // pred_region
        %s1394 = ssub.s32 %s13, 2
        // Predicated region
        $region69: #{graphsage_forward.2} parent=67 // pred_check
          %p1395 = pneg %p202
        $region70: #{graphsage_forward.2} parent=67 // pred_check_branch
          %1397 = sbr.rel (%p1395) target = $region72
        $region71: #{graphsage_forward.2} parent=67 // pred_region
          %s1398 = smul.u32 16, %s24
          %p1399 = scmp.lt.s32.totalorder %s1398, 31
          %s1400 = scalar_select %p1399, %s1398, 31
          %s1401 = smul.addr %s1400, 4
          %s1402 = scalar_lea.vmem %s6, %s1401
        $region72: #{graphsage_forward.2} parent=67 // pred_fallthru
          _
      $region68: #{graphsage_forward.2} parent=5 // pred_fallthru
        _
    $region6: #{graphsage_forward.2} parent=1 // loop_footer
      %s17 = sadd.s32 1, %s13
    $region7: #{graphsage_forward.2} parent=1 // loop_footer_branch
      %12 = sbr.rel target = $region3
    $region8: #{graphsage_forward.2} parent=1 // loop_exit
      _
    %1403 = vsyncpa [#allocation5], 1
    %s1404 = scalar_lea.sflag [#allocation5], 1
    %1405 = vsyncpa %s1404, 1

// kernel: graphsage_forward.3
$region0: #{graphsage_forward.3}
  #allocation0 [shape = 'u32[]', space=smem, size = 0x4, offset = 0x4, fixed_abs, tag = 'smem constant byte address 0x4 - core index']
  #allocation1 [shape = 'u32[144,128]{1,0:T(1,128)}', space=vmem, size = 0x12000, scoped, tag = 'internal scratch']
  #allocation2 [shape = 'f32[128,128]{1,0:T(8,128)}', space=vmem, size = 0x10000, scoped, tag = 'scratch operand']
  #allocation3 [shape = 'f32[128,128]{1,0:T(8,128)}', space=vmem, size = 0x10000, scoped, tag = 'scratch operand']
  %s0 = inlined_call_operand.vmem [shape: s8[256,256], index: 0, kind: input, shape index: {}]
  %s1 = inlined_call_operand.vmem [shape: bf16[256,128], index: 1, kind: input, shape index: {}, may-alias: {1,2}]
  %s2 = inlined_call_operand.vmem [shape: bf16[256,128], index: 2, kind: input, shape index: {}, may-alias: {1,2}]
  %s3 = inlined_call_operand.vmem [shape: f32[256,1], index: 3, kind: input, shape index: {}]
  %s4 = inlined_call_operand.vmem [shape: bf16[256,128], index: 4, kind: input, shape index: {}]
  %s5 = inlined_call_operand.vmem [shape: f32[1,128], index: 5, kind: input, shape index: {}]
  %s6 = inlined_call_operand.hbm [shape: f32[256,128], index: 6, kind: output, shape index: {}]
  %s7 = sld [smem:[#allocation0]]
  $region69: #{graphsage_forward.3} parent=0
    _
  %s9 = ssub.s32 1, %s7
  %s10 = scalar_select 0, %s9, %s7
  $region1: #{graphsage_forward.3} parent=0
    #allocation4 [shape = 'u8[131072]{0}', space=vmem, size = 0x20000, scoped, tag = 'output window, operand 0']
    #allocation5 [shape = 's32[2]{0}', space=sflag, size = 0x8, scoped, tag = 'scoped memory for graphsage_forward.3']
    %11 = vsyncpa [#allocation5], 0
    %s12 = scalar_lea.sflag [#allocation5], 1
    %13 = vsyncpa %s12, 0
    loop: start=0, step=1, limit=4
    $region2: #{graphsage_forward.3} parent=1 // loop_pre_header
      _
    $region3: #{graphsage_forward.3} parent=1 // loop_header
      %s15 = sphi 0, %s19
      %p16 = scmp.ge.s32.totalorder %s15, 4
      %s22 = sphi 0, %s34
      %s23 = sphi 0, %s30
      %s24 = sphi 0, %s22
      %s25 = sphi 0, %s23
      %s26 = sphi 0, %s24
      %s27 = sphi 0, %s25
      %s39 = sphi 0, %s41
      %s42 = sphi 0, %s39
      %s43 = sphi 0, %s42
      %s59 = sphi 0, %s43
      %s65 = sphi 0, %s67
      %s68 = sphi 0, %s65
      %s69 = sphi 0, %s68
      %s85 = sphi 0, %s69
      %s91 = sphi 0, %s93
      %s94 = sphi 0, %s91
      %s95 = sphi 0, %s94
      %s111 = sphi 0, %s95
      %s117 = sphi 0, %s119
      %s120 = sphi 0, %s117
      %s121 = sphi 0, %s120
      %s137 = sphi 0, %s121
      %s141 = sphi 0, %s141
      %s143 = sphi 0, %s141
      %s144 = sphi 0, %s143
      %s158 = sphi 0, %s144
      %s162 = sphi 0, %s162
      %s164 = sphi 0, %s162
      %s165 = sphi 0, %s164
      %s179 = sphi 0, %s165
      %s185 = sphi 0, %s187
      %s188 = sphi 0, %s185
      %s189 = sphi 0, %s188
      %s205 = sphi 0, %s189
    $region4: #{graphsage_forward.3} parent=1 // loop_header_branch
      %18 = sbr.rel (%p16) target = $region8
    $region5: #{graphsage_forward.3} parent=1 // loop_body
      %s20 = ssub.s32 %s15, 1
      %s21 = ssub.s32 %s15, 2
      %s28 = sadd.s32 1, %s23
      %p29 = scmp.ge.s32.totalorder %s28, 1
      %s30 = scalar_select %p29, 0, %s28
      %s31 = sadd.s32 1, %s22
      %s32 = scalar_select %p29, %s31, %s22
      %p33 = scmp.ge.s32.totalorder %s32, 2
      %s34 = scalar_select %p33, 0, %s32
      %s35 = ssub.s32 %s22, %s34
      %s36 = ssub.s32 %s23, %s30
      %s37 = sor.u32 %s35, %s36
      %p38 = scmp.eq.s32.totalorder %s37, 0
      %s40 = sadd.s32 %s39, 1
      %s41 = scalar_select %p38, %s39, %s40
      %p44 = pneg %p38
      %p45 = scmp.eq.s32.totalorder %s15, 1
      %p46 = por %p44, %p45
      %p47 = scmp.ne.s32.totalorder %s39, %s42
      %p48 = scmp.eq.s32.totalorder %s15, 0
      %p49 = por %p47, %p48
      %p50 = scmp.ne.s32.totalorder %s39, %s42
      %p51 = scmp.eq.s32.totalorder %s20, 1
      %p52 = por %p50, %p51
      %p53 = scmp.ne.s32.totalorder %s42, %s43
      %p54 = scmp.eq.s32.totalorder %s20, 0
      %p55 = por %p53, %p54
      %p56 = scmp.ne.s32.totalorder %s42, %s43
      %p57 = scmp.eq.s32.totalorder %s21, 1
      %p58 = por %p56, %p57
      %p60 = scmp.ne.s32.totalorder %s43, %s59
      %p61 = scmp.eq.s32.totalorder %s21, 0
      %p62 = por %p60, %p61
      %s63 = ssub.s32 %s23, %s30
      %p64 = scmp.eq.s32.totalorder %s63, 0
      %s66 = sadd.s32 %s65, 1
      %s67 = scalar_select %p64, %s65, %s66
      %p70 = pneg %p64
      %p71 = scmp.eq.s32.totalorder %s15, 1
      %p72 = por %p70, %p71
      %p73 = scmp.ne.s32.totalorder %s65, %s68
      %p74 = scmp.eq.s32.totalorder %s15, 0
      %p75 = por %p73, %p74
      %p76 = scmp.ne.s32.totalorder %s65, %s68
      %p77 = scmp.eq.s32.totalorder %s20, 1
      %p78 = por %p76, %p77
      %p79 = scmp.ne.s32.totalorder %s68, %s69
      %p80 = scmp.eq.s32.totalorder %s20, 0
      %p81 = por %p79, %p80
      %p82 = scmp.ne.s32.totalorder %s68, %s69
      %p83 = scmp.eq.s32.totalorder %s21, 1
      %p84 = por %p82, %p83
      %p86 = scmp.ne.s32.totalorder %s69, %s85
      %p87 = scmp.eq.s32.totalorder %s21, 0
      %p88 = por %p86, %p87
      %s89 = ssub.s32 %s22, %s34
      %p90 = scmp.eq.s32.totalorder %s89, 0
      %s92 = sadd.s32 %s91, 1
      %s93 = scalar_select %p90, %s91, %s92
      %p96 = pneg %p90
      %p97 = scmp.eq.s32.totalorder %s15, 1
      %p98 = por %p96, %p97
      %p99 = scmp.ne.s32.totalorder %s91, %s94
      %p100 = scmp.eq.s32.totalorder %s15, 0
      %p101 = por %p99, %p100
      %p102 = scmp.ne.s32.totalorder %s91, %s94
      %p103 = scmp.eq.s32.totalorder %s20, 1
      %p104 = por %p102, %p103
      %p105 = scmp.ne.s32.totalorder %s94, %s95
      %p106 = scmp.eq.s32.totalorder %s20, 0
      %p107 = por %p105, %p106
      %p108 = scmp.ne.s32.totalorder %s94, %s95
      %p109 = scmp.eq.s32.totalorder %s21, 1
      %p110 = por %p108, %p109
      %p112 = scmp.ne.s32.totalorder %s95, %s111
      %p113 = scmp.eq.s32.totalorder %s21, 0
      %p114 = por %p112, %p113
      %s115 = ssub.s32 %s22, %s34
      %p116 = scmp.eq.s32.totalorder %s115, 0
      %s118 = sadd.s32 %s117, 1
      %s119 = scalar_select %p116, %s117, %s118
      %p122 = pneg %p116
      %p123 = scmp.eq.s32.totalorder %s15, 1
      %p124 = por %p122, %p123
      %p125 = scmp.ne.s32.totalorder %s117, %s120
      %p126 = scmp.eq.s32.totalorder %s15, 0
      %p127 = por %p125, %p126
      %p128 = scmp.ne.s32.totalorder %s117, %s120
      %p129 = scmp.eq.s32.totalorder %s20, 1
      %p130 = por %p128, %p129
      %p131 = scmp.ne.s32.totalorder %s120, %s121
      %p132 = scmp.eq.s32.totalorder %s20, 0
      %p133 = por %p131, %p132
      %p134 = scmp.ne.s32.totalorder %s120, %s121
      %p135 = scmp.eq.s32.totalorder %s21, 1
      %p136 = por %p134, %p135
      %p138 = scmp.ne.s32.totalorder %s121, %s137
      %p139 = scmp.eq.s32.totalorder %s21, 0
      %p140 = por %p138, %p139
      %s142 = sadd.s32 %s141, 1
      %p145 = scmp.eq.s32.totalorder %s15, 1
      %p146 = scmp.ne.s32.totalorder %s141, %s143
      %p147 = scmp.eq.s32.totalorder %s15, 0
      %p148 = por %p146, %p147
      %p149 = scmp.ne.s32.totalorder %s141, %s143
      %p150 = scmp.eq.s32.totalorder %s20, 1
      %p151 = por %p149, %p150
      %p152 = scmp.ne.s32.totalorder %s143, %s144
      %p153 = scmp.eq.s32.totalorder %s20, 0
      %p154 = por %p152, %p153
      %p155 = scmp.ne.s32.totalorder %s143, %s144
      %p156 = scmp.eq.s32.totalorder %s21, 1
      %p157 = por %p155, %p156
      %p159 = scmp.ne.s32.totalorder %s144, %s158
      %p160 = scmp.eq.s32.totalorder %s21, 0
      %p161 = por %p159, %p160
      %s163 = sadd.s32 %s162, 1
      %p166 = scmp.eq.s32.totalorder %s15, 1
      %p167 = scmp.ne.s32.totalorder %s162, %s164
      %p168 = scmp.eq.s32.totalorder %s15, 0
      %p169 = por %p167, %p168
      %p170 = scmp.ne.s32.totalorder %s162, %s164
      %p171 = scmp.eq.s32.totalorder %s20, 1
      %p172 = por %p170, %p171
      %p173 = scmp.ne.s32.totalorder %s164, %s165
      %p174 = scmp.eq.s32.totalorder %s20, 0
      %p175 = por %p173, %p174
      %p176 = scmp.ne.s32.totalorder %s164, %s165
      %p177 = scmp.eq.s32.totalorder %s21, 1
      %p178 = por %p176, %p177
      %p180 = scmp.ne.s32.totalorder %s165, %s179
      %p181 = scmp.eq.s32.totalorder %s21, 0
      %p182 = por %p180, %p181
      %s183 = ssub.s32 %s22, %s34
      %p184 = scmp.eq.s32.totalorder %s183, 0
      %s186 = sadd.s32 %s185, 1
      %s187 = scalar_select %p184, %s185, %s186
      %p190 = pneg %p184
      %p191 = scmp.eq.s32.totalorder %s15, 1
      %p192 = por %p190, %p191
      %p193 = scmp.ne.s32.totalorder %s185, %s188
      %p194 = scmp.eq.s32.totalorder %s15, 0
      %p195 = por %p193, %p194
      %p196 = scmp.ne.s32.totalorder %s185, %s188
      %p197 = scmp.eq.s32.totalorder %s20, 1
      %p198 = por %p196, %p197
      %p199 = scmp.ne.s32.totalorder %s188, %s189
      %p200 = scmp.eq.s32.totalorder %s20, 0
      %p201 = por %p199, %p200
      %p202 = scmp.ne.s32.totalorder %s188, %s189
      %p203 = scmp.eq.s32.totalorder %s21, 1
      %p204 = por %p202, %p203
      %p206 = scmp.ne.s32.totalorder %s189, %s205
      %p207 = scmp.eq.s32.totalorder %s21, 0
      %p208 = por %p206, %p207
      %p209 = scmp.le.s32.totalorder 1, %s15
      %p210 = scmp.lt.s32.totalorder %s15, 3
      %p211 = pnand %p209, %p210
      %p212 = pneg %p211
      // Predicated region
      $region9: #{graphsage_forward.3} parent=5 // pred_check
        _
      $region10: #{graphsage_forward.3} parent=5 // pred_check_branch
        %214 = sbr.rel (%p211) target = $region12
      $region11: #{graphsage_forward.3} parent=5 // pred_region
        %s215 = ssub.s32 %s15, 1
        // Predicated region
        $region13: #{graphsage_forward.3} parent=11 // pred_check
          %p216 = pneg %p81
        $region14: #{graphsage_forward.3} parent=11 // pred_check_branch
          %218 = sbr.rel (%p216) target = $region16
        $region15: #{graphsage_forward.3} parent=11 // pred_region
          %s219 = smul.u32 32, %s25
          %p220 = scmp.lt.s32.totalorder %s219, 31
          %s221 = scalar_select %p220, %s219, 31
          %s222 = smul.addr %s221, 4
          %s223 = scalar_lea.vmem %s1, %s222
          %s224 = smul.u32 32, %s25
        $region16: #{graphsage_forward.3} parent=11 // pred_fallthru
          _
        // Predicated region
        $region17: #{graphsage_forward.3} parent=11 // pred_check
          %p225 = pneg %p154
        $region18: #{graphsage_forward.3} parent=11 // pred_check_branch
          %227 = sbr.rel (%p225) target = $region20
        $region19: #{graphsage_forward.3} parent=11 // pred_region
          _
        $region20: #{graphsage_forward.3} parent=11 // pred_fallthru
          _
        // Predicated region
        $region21: #{graphsage_forward.3} parent=11 // pred_check
          %p228 = pneg %p175
        $region22: #{graphsage_forward.3} parent=11 // pred_check_branch
          %230 = sbr.rel (%p228) target = $region24
        $region23: #{graphsage_forward.3} parent=11 // pred_region
          _
        $region24: #{graphsage_forward.3} parent=11 // pred_fallthru
          _
      $region12: #{graphsage_forward.3} parent=5 // pred_fallthru
        _
      %p231 = scmp.lt.s32.totalorder %s15, 2
      // Predicated region
      $region25: #{graphsage_forward.3} parent=5 // pred_check
        %p232 = pneg %p231
      $region26: #{graphsage_forward.3} parent=5 // pred_check_branch
        %234 = sbr.rel (%p232) target = $region28
      $region27: #{graphsage_forward.3} parent=5 // pred_region
        // Predicated region
        $region29: #{graphsage_forward.3} parent=27 // pred_check
          %p235 = pneg %p49
        $region30: #{graphsage_forward.3} parent=27 // pred_check_branch
          %237 = sbr.rel (%p235) target = $region32
        $region31: #{graphsage_forward.3} parent=27 // pred_region
          %s238 = smul.u32 4, %s22
          %s239 = smul.u32 2, %s23
          %p240 = scmp.lt.s32.totalorder %s238, 7
          %s241 = scalar_select %p240, %s238, 7
          %p242 = scmp.lt.s32.totalorder %s239, 1
          %s243 = scalar_select %p242, %s239, 1
          %s244 = smul.addr %s241, 2
          %s245 = sadd.s32 %s243, %s244
          %s246 = smul.addr %s245, 8
          %s247 = scalar_lea.vmem %s0, %s246
          %s248 = smul.u32 4, %s22
          %s249 = smul.u32 2, %s23
        $region32: #{graphsage_forward.3} parent=27 // pred_fallthru
          _
        // Predicated region
        $region33: #{graphsage_forward.3} parent=27 // pred_check
          %p250 = pneg %p101
        $region34: #{graphsage_forward.3} parent=27 // pred_check_branch
          %252 = sbr.rel (%p250) target = $region36
        $region35: #{graphsage_forward.3} parent=27 // pred_region
          %s253 = smul.u32 16, %s22
          %p254 = scmp.lt.s32.totalorder %s253, 31
          %s255 = scalar_select %p254, %s253, 31
          %s256 = smul.addr %s255, 4
          %s257 = scalar_lea.vmem %s2, %s256
          %s258 = smul.u32 16, %s22
        $region36: #{graphsage_forward.3} parent=27 // pred_fallthru
          _
        // Predicated region
        $region37: #{graphsage_forward.3} parent=27 // pred_check
          %p259 = pneg %p127
        $region38: #{graphsage_forward.3} parent=27 // pred_check_branch
          %261 = sbr.rel (%p259) target = $region40
        $region39: #{graphsage_forward.3} parent=27 // pred_region
          %s262 = smul.u32 16, %s22
          %p263 = scmp.lt.s32.totalorder %s262, 31
          %s264 = scalar_select %p263, %s262, 31
          %s265 = smul.addr %s264, 8
          %s266 = scalar_lea.vmem %s3, %s265
          %s267 = smul.u32 16, %s22
        $region40: #{graphsage_forward.3} parent=27 // pred_fallthru
          _
      $region28: #{graphsage_forward.3} parent=5 // pred_fallthru
        _
      %p268 = scmp.le.s32.totalorder 1, %s15
      %p269 = scmp.lt.s32.totalorder %s15, 3
      %p270 = pnand %p268, %p269
      %p271 = pneg %p270
      // Predicated region
      $region41: #{graphsage_forward.3} parent=5 // pred_check
        _
      $region42: #{graphsage_forward.3} parent=5 // pred_check_branch
        %273 = sbr.rel (%p270) target = $region44
      $region43: #{graphsage_forward.3} parent=5 // pred_region
        %s274 = ssub.s32 %s15, 1
        %s275 = smul.u32 4, %s24
        %s276 = smul.u32 2, %s25
        %p277 = scmp.lt.s32.totalorder %s275, 7
        %s278 = scalar_select %p277, %s275, 7
        %p279 = scmp.lt.s32.totalorder %s276, 1
        %s280 = scalar_select %p279, %s276, 1
        %s281 = smul.addr %s278, 2
        %s282 = sadd.s32 %s280, %s281
        %s283 = smul.addr %s282, 8
        %s284 = scalar_lea.vmem %s0, %s283
        %p285 = pneg %p55
        %p286 = pneg %p52
        %s287 = smul.u32 32, %s25
        %p288 = scmp.lt.s32.totalorder %s287, 31
        %s289 = scalar_select %p288, %s287, 31
        %s290 = smul.addr %s289, 4
        %s291 = scalar_lea.vmem %s1, %s290
        %p292 = pneg %p81
        %p293 = pneg %p78
        %s294 = smul.u32 16, %s24
        %p295 = scmp.lt.s32.totalorder %s294, 31
        %s296 = scalar_select %p295, %s294, 31
        %s297 = smul.addr %s296, 4
        %s298 = scalar_lea.vmem %s2, %s297
        %p299 = pneg %p107
        %p300 = pneg %p104
        %s301 = smul.u32 16, %s24
        %p302 = scmp.lt.s32.totalorder %s301, 31
        %s303 = scalar_select %p302, %s301, 31
        %s304 = smul.addr %s303, 8
        %s305 = scalar_lea.vmem %s3, %s304
        %p306 = pneg %p133
        %p307 = pneg %p130
        %p308 = pneg %p154
        %p309 = pneg %p151
        %p310 = pneg %p175
        %p311 = pneg %p172
        %p312 = pneg %p201
        %p313 = pneg %p198
        %s314 = sand.u32 %s188, 1
        %s315 = scalar_lea.sflag [#allocation5], %s314
        %s316 = sand.u32 %s188, 1
        %s317 = smul.addr %s316, 128
        %s318 = scalar_lea.vmem [#allocation4], %s317
        %s319 = smul.u32 4, %s24
        %s320 = smul.u32 2, %s25
        %p321 = scmp.lt.s32.totalorder %s319, 7
        %s322 = scalar_select %p321, %s319, 7
        %p323 = scmp.lt.s32.totalorder %s320, 1
        %s324 = scalar_select %p323, %s320, 1
        %s325 = smul.addr %s322, 2
        %s326 = sadd.s32 %s324, %s325
        %s327 = smul.addr %s326, 8
        %s328 = scalar_lea.vmem %s0, %s327
        %s329 = smul.u32 4, %s24
        %s330 = smul.u32 2, %s25
        %s331 = smul.u32 32, %s25
        %p332 = scmp.lt.s32.totalorder %s331, 31
        %s333 = scalar_select %p332, %s331, 31
        %s334 = smul.addr %s333, 4
        %s335 = scalar_lea.vmem %s1, %s334
        %s336 = smul.u32 32, %s25
        %s337 = smul.u32 16, %s24
        %p338 = scmp.lt.s32.totalorder %s337, 31
        %s339 = scalar_select %p338, %s337, 31
        %s340 = smul.addr %s339, 4
        %s341 = scalar_lea.vmem %s2, %s340
        %s342 = smul.u32 16, %s24
        %s343 = smul.u32 16, %s24
        %p344 = scmp.lt.s32.totalorder %s343, 31
        %s345 = scalar_select %p344, %s343, 31
        %s346 = smul.addr %s345, 8
        %s347 = scalar_lea.vmem %s3, %s346
        %s348 = smul.u32 16, %s24
        %s349 = smul.u32 16, %s24
        %v351 = vld [vmem:[%s328] sm:$0xff]
        %v352 = vld [vmem:[%s328 + $0x8] sm:$0xff]
        %v353 = vld [vmem:[%s328 + $0x10] sm:$0xff]
        %v354 = vld [vmem:[%s328 + $0x18] sm:$0xff]
        %v355 = vld [vmem:[%s328 + $0x20] sm:$0xff]
        %v356 = vld [vmem:[%s328 + $0x28] sm:$0xff]
        %v357 = vld [vmem:[%s328 + $0x30] sm:$0xff]
        %v358 = vld [vmem:[%s328 + $0x38] sm:$0xff]
        %v359 = vunpack.c.l.s8.bf16 %v351
        %v360 = vunpack.c.l.s8.bf16 %v352
        %v361 = vunpack.c.h.s8.bf16 %v351
        %v362 = vunpack.c.h.s8.bf16 %v352
        %v363 = vunpack.c.l.s8.bf16 %v353
        %v364 = vunpack.c.l.s8.bf16 %v354
        %v365 = vunpack.c.h.s8.bf16 %v353
        %v366 = vunpack.c.h.s8.bf16 %v354
        %v367 = vunpack.c.l.s8.bf16 %v355
        %v368 = vunpack.c.l.s8.bf16 %v356
        %v369 = vunpack.c.h.s8.bf16 %v355
        %v370 = vunpack.c.h.s8.bf16 %v356
        %v371 = vunpack.c.l.s8.bf16 %v357
        %v372 = vunpack.c.l.s8.bf16 %v358
        %v373 = vunpack.c.h.s8.bf16 %v357
        %v374 = vunpack.c.h.s8.bf16 %v358
        %v375 = vld [vmem:[%s335] sm:$0xf]
        %v376 = vld [vmem:[%s335 + $0x4] sm:$0xf]
        %v377 = vld [vmem:[%s335 + $0x8] sm:$0xf]
        %v378 = vld [vmem:[%s335 + $0xc] sm:$0xf]
        %v379 = vld [vmem:[%s335 + $0x10] sm:$0xf]
        %v380 = vld [vmem:[%s335 + $0x14] sm:$0xf]
        %v381 = vld [vmem:[%s335 + $0x18] sm:$0xf]
        %v382 = vld [vmem:[%s335 + $0x1c] sm:$0xf]
        %v383 = vld [vmem:[%s335 + $0x20] sm:$0xf]
        %v384 = vld [vmem:[%s335 + $0x24] sm:$0xf]
        %v385 = vld [vmem:[%s335 + $0x28] sm:$0xf]
        %v386 = vld [vmem:[%s335 + $0x2c] sm:$0xf]
        %v387 = vld [vmem:[%s335 + $0x30] sm:$0xf]
        %v388 = vld [vmem:[%s335 + $0x34] sm:$0xf]
        %v389 = vld [vmem:[%s335 + $0x38] sm:$0xf]
        %v390 = vld [vmem:[%s335 + $0x3c] sm:$0xf]
        %v391 = vld [vmem:[%s335 + $0x40] sm:$0xf]
        %v392 = vld [vmem:[%s335 + $0x44] sm:$0xf]
        %v393 = vld [vmem:[%s335 + $0x48] sm:$0xf]
        %v394 = vld [vmem:[%s335 + $0x4c] sm:$0xf]
        %v395 = vld [vmem:[%s335 + $0x50] sm:$0xf]
        %v396 = vld [vmem:[%s335 + $0x54] sm:$0xf]
        %v397 = vld [vmem:[%s335 + $0x58] sm:$0xf]
        %v398 = vld [vmem:[%s335 + $0x5c] sm:$0xf]
        %v399 = vld [vmem:[%s335 + $0x60] sm:$0xf]
        %v400 = vld [vmem:[%s335 + $0x64] sm:$0xf]
        %v401 = vld [vmem:[%s335 + $0x68] sm:$0xf]
        %v402 = vld [vmem:[%s335 + $0x6c] sm:$0xf]
        %v403 = vld [vmem:[%s335 + $0x70] sm:$0xf]
        %v404 = vld [vmem:[%s335 + $0x74] sm:$0xf]
        %v405 = vld [vmem:[%s335 + $0x78] sm:$0xf]
        %v406 = vld [vmem:[%s335 + $0x7c] sm:$0xf]
        %v439 = vunpack.c.l.b16 %v375
        %v440 = vunpack.c.l.b16 %v376
        %v441 = vunpack.c.l.b16 %v377
        %v442 = vunpack.c.l.b16 %v378
        %v443 = vunpack.c.l.b16 %v379
        %v444 = vunpack.c.l.b16 %v380
        %v445 = vunpack.c.l.b16 %v381
        %v446 = vunpack.c.l.b16 %v382
        %v447 = vunpack.c.l.b16 %v383
        %v448 = vunpack.c.l.b16 %v384
        %v449 = vunpack.c.l.b16 %v385
        %v450 = vunpack.c.l.b16 %v386
        %v451 = vunpack.c.l.b16 %v387
        %v452 = vunpack.c.l.b16 %v388
        %v453 = vunpack.c.l.b16 %v389
        %v454 = vunpack.c.l.b16 %v390
        %v455 = vunpack.c.l.b16 %v391
        %v456 = vunpack.c.l.b16 %v392
        %v457 = vunpack.c.l.b16 %v393
        %v458 = vunpack.c.l.b16 %v394
        %v459 = vunpack.c.l.b16 %v395
        %v460 = vunpack.c.l.b16 %v396
        %v461 = vunpack.c.l.b16 %v397
        %v462 = vunpack.c.l.b16 %v398
        %v463 = vunpack.c.l.b16 %v399
        %v464 = vunpack.c.l.b16 %v400
        %v465 = vunpack.c.l.b16 %v401
        %v466 = vunpack.c.l.b16 %v402
        %v467 = vunpack.c.l.b16 %v403
        %v468 = vunpack.c.l.b16 %v404
        %v469 = vunpack.c.l.b16 %v405
        %v470 = vunpack.c.l.b16 %v406
        %v471 = vpack.c.b16 %v440, %v439
        %v472 = vpack.c.b16 %v442, %v441
        %v473 = vpack.c.b16 %v444, %v443
        %v474 = vpack.c.b16 %v446, %v445
        %v475 = vpack.c.b16 %v448, %v447
        %v476 = vpack.c.b16 %v450, %v449
        %v477 = vpack.c.b16 %v452, %v451
        %v478 = vpack.c.b16 %v454, %v453
        %v479 = vpack.c.b16 %v456, %v455
        %v480 = vpack.c.b16 %v458, %v457
        %v481 = vpack.c.b16 %v460, %v459
        %v482 = vpack.c.b16 %v462, %v461
        %v483 = vpack.c.b16 %v464, %v463
        %v484 = vpack.c.b16 %v466, %v465
        %v485 = vpack.c.b16 %v468, %v467
        %v486 = vpack.c.b16 %v470, %v469
        %503 = vmatprep.subr.bf16.mxu0 0
        %504 = vmatpush1.bf16.msra.mxu0 %v471
        %505 = vmatprep.subr.bf16.mxu0 0
        %506 = vmatpush1.bf16.msra.mxu0 %v472
        %507 = vmatprep.subr.bf16.mxu0 0
        %508 = vmatpush1.bf16.msra.mxu0 %v473
        %509 = vmatprep.subr.bf16.mxu0 0
        %510 = vmatpush1.bf16.msra.mxu0 %v474
        %511 = vmatprep.subr.bf16.mxu0 0
        %512 = vmatpush1.bf16.msra.mxu0 %v475
        %513 = vmatprep.subr.bf16.mxu0 0
        %514 = vmatpush1.bf16.msra.mxu0 %v476
        %515 = vmatprep.subr.bf16.mxu0 0
        %516 = vmatpush1.bf16.msra.mxu0 %v477
        %517 = vmatprep.subr.bf16.mxu0 0
        %518 = vmatpush1.bf16.msra.mxu0 %v478
        %519 = vmatprep.subr.bf16.mxu0 0
        %520 = vmatpush1.bf16.msra.mxu0 %v479
        %521 = vmatprep.subr.bf16.mxu0 0
        %522 = vmatpush1.bf16.msra.mxu0 %v480
        %523 = vmatprep.subr.bf16.mxu0 0
        %524 = vmatpush1.bf16.msra.mxu0 %v481
        %525 = vmatprep.subr.bf16.mxu0 0
        %526 = vmatpush1.bf16.msra.mxu0 %v482
        %527 = vmatprep.subr.bf16.mxu0 0
        %528 = vmatpush1.bf16.msra.mxu0 %v483
        %529 = vmatprep.subr.bf16.mxu0 0
        %530 = vmatpush1.bf16.msra.mxu0 %v484
        %531 = vmatprep.subr.bf16.mxu0 0
        %532 = vmatpush1.bf16.msra.mxu0 %v485
        %533 = vmatprep.subr.bf16.mxu0 0
        %534 = vmatpush1.bf16.msra.mxu0 %v486
        %535 = vmatprep.mubr.bf16.mxu0 %v360
        %536 = vmatmul.mubr.bf16.gmra.mrb[0].mxu0 %v359
        %v537 = vpop.f32.mrb[0].mxu0
        %v538 = vadd.f32 0.0, %v537
        %v539 = vpop.f32.mrb[0].mxu0
        %v540 = vpop.f32.mrb[0].mxu0
        %v541 = vadd.f32 0.0, %v540
        %v542 = vpop.f32.mrb[0].mxu0
        %543 = vmatprep.mubr.bf16.mxu0 %v362
        %544 = vmatmul.mubr.bf16.gmra.mrb[0].mxu0 %v361
        %v545 = vpop.f32.mrb[0].mxu0
        %v546 = vadd.f32 0.0, %v545
        %v547 = vpop.f32.mrb[0].mxu0
        %v548 = vpop.f32.mrb[0].mxu0
        %v549 = vadd.f32 0.0, %v548
        %v550 = vpop.f32.mrb[0].mxu0
        %551 = vmatprep.mubr.bf16.mxu0 %v364
        %552 = vmatmul.mubr.bf16.gmra.mrb[0].mxu0 %v363
        %v553 = vpop.f32.mrb[0].mxu0
        %v554 = vadd.f32 0.0, %v553
        %v555 = vpop.f32.mrb[0].mxu0
        %v556 = vpop.f32.mrb[0].mxu0
        %v557 = vadd.f32 0.0, %v556
        %v558 = vpop.f32.mrb[0].mxu0
        %559 = vmatprep.mubr.bf16.mxu0 %v366
        %560 = vmatmul.mubr.bf16.gmra.mrb[0].mxu0 %v365
        %v561 = vpop.f32.mrb[0].mxu0
        %v562 = vadd.f32 0.0, %v561
        %v563 = vpop.f32.mrb[0].mxu0
        %v564 = vpop.f32.mrb[0].mxu0
        %v565 = vadd.f32 0.0, %v564
        %v566 = vpop.f32.mrb[0].mxu0
        %567 = vmatprep.mubr.bf16.mxu0 %v368
        %568 = vmatmul.mubr.bf16.gmra.mrb[0].mxu0 %v367
        %v569 = vpop.f32.mrb[0].mxu0
        %v570 = vadd.f32 0.0, %v569
        %v571 = vpop.f32.mrb[0].mxu0
        %v572 = vpop.f32.mrb[0].mxu0
        %v573 = vadd.f32 0.0, %v572
        %v574 = vpop.f32.mrb[0].mxu0
        %575 = vmatprep.mubr.bf16.mxu0 %v370
        %576 = vmatmul.mubr.bf16.gmra.mrb[0].mxu0 %v369
        %v577 = vpop.f32.mrb[0].mxu0
        %v578 = vadd.f32 0.0, %v577
        %v579 = vpop.f32.mrb[0].mxu0
        %v580 = vpop.f32.mrb[0].mxu0
        %v581 = vadd.f32 0.0, %v580
        %v582 = vpop.f32.mrb[0].mxu0
        %583 = vmatprep.mubr.bf16.mxu0 %v372
        %584 = vmatmul.mubr.bf16.gmra.mrb[0].mxu0 %v371
        %v585 = vpop.f32.mrb[0].mxu0
        %v586 = vadd.f32 0.0, %v585
        %v587 = vpop.f32.mrb[0].mxu0
        %v588 = vpop.f32.mrb[0].mxu0
        %v589 = vadd.f32 0.0, %v588
        %v590 = vpop.f32.mrb[0].mxu0
        %591 = vmatprep.mubr.bf16.mxu0 %v374
        %592 = vmatmul.mubr.bf16.gmra.mrb[0].mxu0 %v373
        %v593 = vpop.f32.mrb[0].mxu0
        %v594 = vadd.f32 0.0, %v593
        %v595 = vpop.f32.mrb[0].mxu0
        %v596 = vpop.f32.mrb[0].mxu0
        %v597 = vadd.f32 0.0, %v596
        %v598 = vpop.f32.mrb[0].mxu0
        %599 = vdwg.mxu0
        %p600 = scmp.eq.s32.totalorder %s25, 0
        // Predicated region
        $region45: #{graphsage_forward.3} parent=43 // pred_check
          %p601 = pneg %p600
        $region46: #{graphsage_forward.3} parent=43 // pred_check_branch
          %603 = sbr.rel (%p601) target = $region48
        $region47: #{graphsage_forward.3} parent=43 // pred_region
          %604 = vst [vmem:[#allocation2] sm:$0xff] %v538
          %605 = vst [vmem:[#allocation2 + $0x8] sm:$0xff] %v541
          %606 = vst [vmem:[#allocation2 + $0x10] sm:$0xff] %v546
          %607 = vst [vmem:[#allocation2 + $0x18] sm:$0xff] %v549
          %608 = vst [vmem:[#allocation2 + $0x20] sm:$0xff] %v554
          %609 = vst [vmem:[#allocation2 + $0x28] sm:$0xff] %v557
          %610 = vst [vmem:[#allocation2 + $0x30] sm:$0xff] %v562
          %611 = vst [vmem:[#allocation2 + $0x38] sm:$0xff] %v565
          %612 = vst [vmem:[#allocation2 + $0x40] sm:$0xff] %v570
          %613 = vst [vmem:[#allocation2 + $0x48] sm:$0xff] %v573
          %614 = vst [vmem:[#allocation2 + $0x50] sm:$0xff] %v578
          %615 = vst [vmem:[#allocation2 + $0x58] sm:$0xff] %v581
          %616 = vst [vmem:[#allocation2 + $0x60] sm:$0xff] %v586
          %617 = vst [vmem:[#allocation2 + $0x68] sm:$0xff] %v589
          %618 = vst [vmem:[#allocation2 + $0x70] sm:$0xff] %v594
          %619 = vst [vmem:[#allocation2 + $0x78] sm:$0xff] %v597
          %v620 = vld [vmem:[%s341] sm:$0xf]
          %v621 = vld [vmem:[%s341 + $0x4] sm:$0xf]
          %v622 = vld [vmem:[%s341 + $0x8] sm:$0xf]
          %v623 = vld [vmem:[%s341 + $0xc] sm:$0xf]
          %v624 = vld [vmem:[%s341 + $0x10] sm:$0xf]
          %v625 = vld [vmem:[%s341 + $0x14] sm:$0xf]
          %v626 = vld [vmem:[%s341 + $0x18] sm:$0xf]
          %v627 = vld [vmem:[%s341 + $0x1c] sm:$0xf]
          %v628 = vld [vmem:[%s341 + $0x20] sm:$0xf]
          %v629 = vld [vmem:[%s341 + $0x24] sm:$0xf]
          %v630 = vld [vmem:[%s341 + $0x28] sm:$0xf]
          %v631 = vld [vmem:[%s341 + $0x2c] sm:$0xf]
          %v632 = vld [vmem:[%s341 + $0x30] sm:$0xf]
          %v633 = vld [vmem:[%s341 + $0x34] sm:$0xf]
          %v634 = vld [vmem:[%s341 + $0x38] sm:$0xf]
          %v635 = vld [vmem:[%s341 + $0x3c] sm:$0xf]
          %v636 = vld [vmem:[%s4] sm:$0xf]
          %v637 = vld [vmem:[%s4 + $0x4] sm:$0xf]
          %v638 = vld [vmem:[%s4 + $0x8] sm:$0xf]
          %v639 = vld [vmem:[%s4 + $0xc] sm:$0xf]
          %v640 = vld [vmem:[%s4 + $0x10] sm:$0xf]
          %v641 = vld [vmem:[%s4 + $0x14] sm:$0xf]
          %v642 = vld [vmem:[%s4 + $0x18] sm:$0xf]
          %v643 = vld [vmem:[%s4 + $0x1c] sm:$0xf]
          %v644 = vld [vmem:[%s4 + $0x20] sm:$0xf]
          %v645 = vld [vmem:[%s4 + $0x24] sm:$0xf]
          %v646 = vld [vmem:[%s4 + $0x28] sm:$0xf]
          %v647 = vld [vmem:[%s4 + $0x2c] sm:$0xf]
          %v648 = vld [vmem:[%s4 + $0x30] sm:$0xf]
          %v649 = vld [vmem:[%s4 + $0x34] sm:$0xf]
          %v650 = vld [vmem:[%s4 + $0x38] sm:$0xf]
          %v651 = vld [vmem:[%s4 + $0x3c] sm:$0xf]
          %v668 = vunpack.c.l.b16 %v620
          %v669 = vunpack.c.l.b16 %v621
          %v670 = vunpack.c.l.b16 %v622
          %v671 = vunpack.c.l.b16 %v623
          %v672 = vunpack.c.l.b16 %v624
          %v673 = vunpack.c.l.b16 %v625
          %v674 = vunpack.c.l.b16 %v626
          %v675 = vunpack.c.l.b16 %v627
          %v676 = vunpack.c.l.b16 %v628
          %v677 = vunpack.c.l.b16 %v629
          %v678 = vunpack.c.l.b16 %v630
          %v679 = vunpack.c.l.b16 %v631
          %v680 = vunpack.c.l.b16 %v632
          %v681 = vunpack.c.l.b16 %v633
          %v682 = vunpack.c.l.b16 %v634
          %v683 = vunpack.c.l.b16 %v635
          %v684 = vpack.c.b16 %v669, %v668
          %v685 = vpack.c.b16 %v671, %v670
          %v686 = vpack.c.b16 %v673, %v672
          %v687 = vpack.c.b16 %v675, %v674
          %v688 = vpack.c.b16 %v677, %v676
          %v689 = vpack.c.b16 %v679, %v678
          %v690 = vpack.c.b16 %v681, %v680
          %v691 = vpack.c.b16 %v683, %v682
          %v716 = vunpack.c.l.b16 %v636
          %v717 = vunpack.c.l.b16 %v637
          %v718 = vunpack.c.l.b16 %v638
          %v719 = vunpack.c.l.b16 %v639
          %v720 = vunpack.c.l.b16 %v640
          %v721 = vunpack.c.l.b16 %v641
          %v722 = vunpack.c.l.b16 %v642
          %v723 = vunpack.c.l.b16 %v643
          %v724 = vunpack.c.l.b16 %v644
          %v725 = vunpack.c.l.b16 %v645
          %v726 = vunpack.c.l.b16 %v646
          %v727 = vunpack.c.l.b16 %v647
          %v728 = vunpack.c.l.b16 %v648
          %v729 = vunpack.c.l.b16 %v649
          %v730 = vunpack.c.l.b16 %v650
          %v731 = vunpack.c.l.b16 %v651
          %v732 = vpack.c.b16 %v717, %v716
          %v733 = vpack.c.b16 %v719, %v718
          %v734 = vpack.c.b16 %v721, %v720
          %v735 = vpack.c.b16 %v723, %v722
          %v736 = vpack.c.b16 %v725, %v724
          %v737 = vpack.c.b16 %v727, %v726
          %v738 = vpack.c.b16 %v729, %v728
          %v739 = vpack.c.b16 %v731, %v730
          %748 = vmatprep.subr.bf16.mxu0 0
          %749 = vmatpush1.bf16.msra.mxu0 %v732
          %750 = vmatprep.subr.bf16.mxu0 0
          %751 = vmatpush1.bf16.msra.mxu0 %v733
          %752 = vmatprep.subr.bf16.mxu0 0
          %753 = vmatpush1.bf16.msra.mxu0 %v734
          %754 = vmatprep.subr.bf16.mxu0 0
          %755 = vmatpush1.bf16.msra.mxu0 %v735
          %756 = vmatprep.subr.bf16.mxu0 0
          %757 = vmatpush1.bf16.msra.mxu0 %v736
          %758 = vmatprep.subr.bf16.mxu0 0
          %759 = vmatpush1.bf16.msra.mxu0 %v737
          %760 = vmatprep.subr.bf16.mxu0 0
          %761 = vmatpush1.bf16.msra.mxu0 %v738
          %762 = vmatprep.subr.bf16.mxu0 0
          %763 = vmatpush1.bf16.msra.mxu0 %v739
          %764 = vmatprep.subr.bf16.mxu0 0
          %765 = vmatpush1.bf16.msra.mxu0 0
          %766 = vmatprep.subr.bf16.mxu0 0
          %767 = vmatpush1.bf16.msra.mxu0 0
          %768 = vmatprep.subr.bf16.mxu0 0
          %769 = vmatpush1.bf16.msra.mxu0 0
          %770 = vmatprep.subr.bf16.mxu0 0
          %771 = vmatpush1.bf16.msra.mxu0 0
          %772 = vmatprep.subr.bf16.mxu0 0
          %773 = vmatpush1.bf16.msra.mxu0 0
          %774 = vmatprep.subr.bf16.mxu0 0
          %775 = vmatpush1.bf16.msra.mxu0 0
          %776 = vmatprep.subr.bf16.mxu0 0
          %777 = vmatpush1.bf16.msra.mxu0 0
          %778 = vmatprep.subr.bf16.mxu0 0
          %779 = vmatpush1.bf16.msra.mxu0 0
          %780 = vmatprep.mubr.bf16.mxu0 0
          %781 = vmatmul.mubr.bf16.gmra.mrb[0].mxu0 %v684
          %v782 = vpop.f32.mrb[0].mxu0
          %v783 = vadd.f32 0.0, %v782
          %v784 = vpop.f32.mrb[0].mxu0
          %v785 = vpop.f32.mrb[0].mxu0
          %v786 = vadd.f32 0.0, %v785
          %v787 = vpop.f32.mrb[0].mxu0
          %788 = vmatprep.mubr.bf16.mxu0 0
          %789 = vmatmul.mubr.bf16.gmra.mrb[0].mxu0 %v685
          %v790 = vpop.f32.mrb[0].mxu0
          %v791 = vadd.f32 0.0, %v790
          %v792 = vpop.f32.mrb[0].mxu0
          %v793 = vpop.f32.mrb[0].mxu0
          %v794 = vadd.f32 0.0, %v793
          %v795 = vpop.f32.mrb[0].mxu0
          %796 = vmatprep.mubr.bf16.mxu0 0
          %797 = vmatmul.mubr.bf16.gmra.mrb[0].mxu0 %v686
          %v798 = vpop.f32.mrb[0].mxu0
          %v799 = vadd.f32 0.0, %v798
          %v800 = vpop.f32.mrb[0].mxu0
          %v801 = vpop.f32.mrb[0].mxu0
          %v802 = vadd.f32 0.0, %v801
          %v803 = vpop.f32.mrb[0].mxu0
          %804 = vmatprep.mubr.bf16.mxu0 0
          %805 = vmatmul.mubr.bf16.gmra.mrb[0].mxu0 %v687
          %v806 = vpop.f32.mrb[0].mxu0
          %v807 = vadd.f32 0.0, %v806
          %v808 = vpop.f32.mrb[0].mxu0
          %v809 = vpop.f32.mrb[0].mxu0
          %v810 = vadd.f32 0.0, %v809
          %v811 = vpop.f32.mrb[0].mxu0
          %812 = vmatprep.mubr.bf16.mxu0 0
          %813 = vmatmul.mubr.bf16.gmra.mrb[0].mxu0 %v688
          %v814 = vpop.f32.mrb[0].mxu0
          %v815 = vadd.f32 0.0, %v814
          %v816 = vpop.f32.mrb[0].mxu0
          %v817 = vpop.f32.mrb[0].mxu0
          %v818 = vadd.f32 0.0, %v817
          %v819 = vpop.f32.mrb[0].mxu0
          %820 = vmatprep.mubr.bf16.mxu0 0
          %821 = vmatmul.mubr.bf16.gmra.mrb[0].mxu0 %v689
          %v822 = vpop.f32.mrb[0].mxu0
          %v823 = vadd.f32 0.0, %v822
          %v824 = vpop.f32.mrb[0].mxu0
          %v825 = vpop.f32.mrb[0].mxu0
          %v826 = vadd.f32 0.0, %v825
          %v827 = vpop.f32.mrb[0].mxu0
          %828 = vmatprep.mubr.bf16.mxu0 0
          %829 = vmatmul.mubr.bf16.gmra.mrb[0].mxu0 %v690
          %v830 = vpop.f32.mrb[0].mxu0
          %v831 = vadd.f32 0.0, %v830
          %v832 = vpop.f32.mrb[0].mxu0
          %v833 = vpop.f32.mrb[0].mxu0
          %v834 = vadd.f32 0.0, %v833
          %v835 = vpop.f32.mrb[0].mxu0
          %836 = vmatprep.mubr.bf16.mxu0 0
          %837 = vmatmul.mubr.bf16.gmra.mrb[0].mxu0 %v691
          %v838 = vpop.f32.mrb[0].mxu0
          %v839 = vadd.f32 0.0, %v838
          %v840 = vpop.f32.mrb[0].mxu0
          %v841 = vpop.f32.mrb[0].mxu0
          %v842 = vadd.f32 0.0, %v841
          %v843 = vpop.f32.mrb[0].mxu0
          %844 = vdwg.mxu0
          %845 = vst [vmem:[#allocation3] sm:$0xff] %v783
          %846 = vst [vmem:[#allocation3 + $0x8] sm:$0xff] %v786
          %847 = vst [vmem:[#allocation3 + $0x10] sm:$0xff] %v791
          %848 = vst [vmem:[#allocation3 + $0x18] sm:$0xff] %v794
          %849 = vst [vmem:[#allocation3 + $0x20] sm:$0xff] %v799
          %850 = vst [vmem:[#allocation3 + $0x28] sm:$0xff] %v802
          %851 = vst [vmem:[#allocation3 + $0x30] sm:$0xff] %v807
          %852 = vst [vmem:[#allocation3 + $0x38] sm:$0xff] %v810
          %853 = vst [vmem:[#allocation3 + $0x40] sm:$0xff] %v815
          %854 = vst [vmem:[#allocation3 + $0x48] sm:$0xff] %v818
          %855 = vst [vmem:[#allocation3 + $0x50] sm:$0xff] %v823
          %856 = vst [vmem:[#allocation3 + $0x58] sm:$0xff] %v826
          %857 = vst [vmem:[#allocation3 + $0x60] sm:$0xff] %v831
          %858 = vst [vmem:[#allocation3 + $0x68] sm:$0xff] %v834
          %859 = vst [vmem:[#allocation3 + $0x70] sm:$0xff] %v839
          %860 = vst [vmem:[#allocation3 + $0x78] sm:$0xff] %v842
        $region48: #{graphsage_forward.3} parent=43 // pred_fallthru
          _
        %p861 = scmp.gt.s32.totalorder %s25, 0
        // Predicated region
        $region49: #{graphsage_forward.3} parent=43 // pred_check
          %p862 = pneg %p861
        $region50: #{graphsage_forward.3} parent=43 // pred_check_branch
          %864 = sbr.rel (%p862) target = $region52
        $region51: #{graphsage_forward.3} parent=43 // pred_region
          %v865 = vld [vmem:[#allocation2] sm:$0xff]
          %v866 = vld [vmem:[#allocation2 + $0x8] sm:$0xff]
          %v867 = vld [vmem:[#allocation2 + $0x10] sm:$0xff]
          %v868 = vld [vmem:[#allocation2 + $0x18] sm:$0xff]
          %v869 = vld [vmem:[#allocation2 + $0x20] sm:$0xff]
          %v870 = vld [vmem:[#allocation2 + $0x28] sm:$0xff]
          %v871 = vld [vmem:[#allocation2 + $0x30] sm:$0xff]
          %v872 = vld [vmem:[#allocation2 + $0x38] sm:$0xff]
          %v873 = vld [vmem:[#allocation2 + $0x40] sm:$0xff]
          %v874 = vld [vmem:[#allocation2 + $0x48] sm:$0xff]
          %v875 = vld [vmem:[#allocation2 + $0x50] sm:$0xff]
          %v876 = vld [vmem:[#allocation2 + $0x58] sm:$0xff]
          %v877 = vld [vmem:[#allocation2 + $0x60] sm:$0xff]
          %v878 = vld [vmem:[#allocation2 + $0x68] sm:$0xff]
          %v879 = vld [vmem:[#allocation2 + $0x70] sm:$0xff]
          %v880 = vld [vmem:[#allocation2 + $0x78] sm:$0xff]
          %v881 = vadd.f32 %v865, %v538
          %v882 = vadd.f32 %v866, %v541
          %v883 = vadd.f32 %v867, %v546
          %v884 = vadd.f32 %v868, %v549
          %v885 = vadd.f32 %v869, %v554
          %v886 = vadd.f32 %v870, %v557
          %v887 = vadd.f32 %v871, %v562
          %v888 = vadd.f32 %v872, %v565
          %v889 = vadd.f32 %v873, %v570
          %v890 = vadd.f32 %v874, %v573
          %v891 = vadd.f32 %v875, %v578
          %v892 = vadd.f32 %v876, %v581
          %v893 = vadd.f32 %v877, %v586
          %v894 = vadd.f32 %v878, %v589
          %v895 = vadd.f32 %v879, %v594
          %v896 = vadd.f32 %v880, %v597
          %897 = vst [vmem:[#allocation2] sm:$0xff] %v881
          %898 = vst [vmem:[#allocation2 + $0x8] sm:$0xff] %v882
          %899 = vst [vmem:[#allocation2 + $0x10] sm:$0xff] %v883
          %900 = vst [vmem:[#allocation2 + $0x18] sm:$0xff] %v884
          %901 = vst [vmem:[#allocation2 + $0x20] sm:$0xff] %v885
          %902 = vst [vmem:[#allocation2 + $0x28] sm:$0xff] %v886
          %903 = vst [vmem:[#allocation2 + $0x30] sm:$0xff] %v887
          %904 = vst [vmem:[#allocation2 + $0x38] sm:$0xff] %v888
          %905 = vst [vmem:[#allocation2 + $0x40] sm:$0xff] %v889
          %906 = vst [vmem:[#allocation2 + $0x48] sm:$0xff] %v890
          %907 = vst [vmem:[#allocation2 + $0x50] sm:$0xff] %v891
          %908 = vst [vmem:[#allocation2 + $0x58] sm:$0xff] %v892
          %909 = vst [vmem:[#allocation2 + $0x60] sm:$0xff] %v893
          %910 = vst [vmem:[#allocation2 + $0x68] sm:$0xff] %v894
          %911 = vst [vmem:[#allocation2 + $0x70] sm:$0xff] %v895
          %912 = vst [vmem:[#allocation2 + $0x78] sm:$0xff] %v896
        $region52: #{graphsage_forward.3} parent=43 // pred_fallthru
          _
        // Predicated region
        $region53: #{graphsage_forward.3} parent=43 // pred_check
          %p913 = pneg %p600
        $region54: #{graphsage_forward.3} parent=43 // pred_check_branch
          %915 = sbr.rel (%p913) target = $region56
        $region55: #{graphsage_forward.3} parent=43 // pred_region
          %v916 = vld [vmem:[#allocation2] sm:$0xff]
          %v917 = vld [vmem:[#allocation2 + $0x8] sm:$0xff]
          %v918 = vld [vmem:[#allocation2 + $0x10] sm:$0xff]
          %v919 = vld [vmem:[#allocation2 + $0x18] sm:$0xff]
          %v920 = vld [vmem:[#allocation2 + $0x20] sm:$0xff]
          %v921 = vld [vmem:[#allocation2 + $0x28] sm:$0xff]
          %v922 = vld [vmem:[#allocation2 + $0x30] sm:$0xff]
          %v923 = vld [vmem:[#allocation2 + $0x38] sm:$0xff]
          %v924 = vld [vmem:[#allocation2 + $0x40] sm:$0xff]
          %v925 = vld [vmem:[#allocation2 + $0x48] sm:$0xff]
          %v926 = vld [vmem:[#allocation2 + $0x50] sm:$0xff]
          %v927 = vld [vmem:[#allocation2 + $0x58] sm:$0xff]
          %v928 = vld [vmem:[#allocation2 + $0x60] sm:$0xff]
          %v929 = vld [vmem:[#allocation2 + $0x68] sm:$0xff]
          %v930 = vld [vmem:[#allocation2 + $0x70] sm:$0xff]
          %v931 = vld [vmem:[#allocation2 + $0x78] sm:$0xff]
          %v932 = vld [vmem:[%s347] sm:$0xff]
          %v933 = vld [vmem:[%s347 + $0x8] sm:$0xff]
          %v934 = vld [vmem:[%s347 + $0x10] sm:$0xff]
          %v935 = vld [vmem:[%s347 + $0x18] sm:$0xff]
          %v936 = vld [vmem:[%s347 + $0x20] sm:$0xff]
          %v937 = vld [vmem:[%s347 + $0x28] sm:$0xff]
          %v938 = vld [vmem:[%s347 + $0x30] sm:$0xff]
          %v939 = vld [vmem:[%s347 + $0x38] sm:$0xff]
          %v940 = vld [vmem:[%s347 + $0x40] sm:$0xff]
          %v941 = vld [vmem:[%s347 + $0x48] sm:$0xff]
          %v942 = vld [vmem:[%s347 + $0x50] sm:$0xff]
          %v943 = vld [vmem:[%s347 + $0x58] sm:$0xff]
          %v944 = vld [vmem:[%s347 + $0x60] sm:$0xff]
          %v945 = vld [vmem:[%s347 + $0x68] sm:$0xff]
          %v946 = vld [vmem:[%s347 + $0x70] sm:$0xff]
          %v947 = vld [vmem:[%s347 + $0x78] sm:$0xff]
          %949 = vset.pattern.permute.xlu0 0
          %950 = vperm.xlu0 %949, %v932
          %v951 = vpop.permute.xlu0 %950
          %954 = vset.pattern.permute.xlu0 0
          %955 = vperm.xlu0 %954, %v933
          %v956 = vpop.permute.xlu0 %955
          %959 = vset.pattern.permute.xlu0 0
          %960 = vperm.xlu0 %959, %v934
          %v961 = vpop.permute.xlu0 %960
          %964 = vset.pattern.permute.xlu0 0
          %965 = vperm.xlu0 %964, %v935
          %v966 = vpop.permute.xlu0 %965
          %969 = vset.pattern.permute.xlu0 0
          %970 = vperm.xlu0 %969, %v936
          %v971 = vpop.permute.xlu0 %970
          %974 = vset.pattern.permute.xlu0 0
          %975 = vperm.xlu0 %974, %v937
          %v976 = vpop.permute.xlu0 %975
          %979 = vset.pattern.permute.xlu0 0
          %980 = vperm.xlu0 %979, %v938
          %v981 = vpop.permute.xlu0 %980
          %984 = vset.pattern.permute.xlu0 0
          %985 = vperm.xlu0 %984, %v939
          %v986 = vpop.permute.xlu0 %985
          %989 = vset.pattern.permute.xlu0 0
          %990 = vperm.xlu0 %989, %v940
          %v991 = vpop.permute.xlu0 %990
          %994 = vset.pattern.permute.xlu0 0
          %995 = vperm.xlu0 %994, %v941
          %v996 = vpop.permute.xlu0 %995
          %999 = vset.pattern.permute.xlu0 0
          %1000 = vperm.xlu0 %999, %v942
          %v1001 = vpop.permute.xlu0 %1000
          %1004 = vset.pattern.permute.xlu0 0
          %1005 = vperm.xlu0 %1004, %v943
          %v1006 = vpop.permute.xlu0 %1005
          %1009 = vset.pattern.permute.xlu0 0
          %1010 = vperm.xlu0 %1009, %v944
          %v1011 = vpop.permute.xlu0 %1010
          %1014 = vset.pattern.permute.xlu0 0
          %1015 = vperm.xlu0 %1014, %v945
          %v1016 = vpop.permute.xlu0 %1015
          %1019 = vset.pattern.permute.xlu0 0
          %1020 = vperm.xlu0 %1019, %v946
          %v1021 = vpop.permute.xlu0 %1020
          %1024 = vset.pattern.permute.xlu0 0
          %1025 = vperm.xlu0 %1024, %v947
          %v1026 = vpop.permute.xlu0 %1025
          %v1028 = vmul.f32 %v916, %v951
          %v1029 = vmul.f32 %v917, %v956
          %v1030 = vmul.f32 %v918, %v961
          %v1031 = vmul.f32 %v919, %v966
          %v1032 = vmul.f32 %v920, %v971
          %v1033 = vmul.f32 %v921, %v976
          %v1034 = vmul.f32 %v922, %v981
          %v1035 = vmul.f32 %v923, %v986
          %v1036 = vmul.f32 %v924, %v991
          %v1037 = vmul.f32 %v925, %v996
          %v1038 = vmul.f32 %v926, %v1001
          %v1039 = vmul.f32 %v927, %v1006
          %v1040 = vmul.f32 %v928, %v1011
          %v1041 = vmul.f32 %v929, %v1016
          %v1042 = vmul.f32 %v930, %v1021
          %v1043 = vmul.f32 %v931, %v1026
          %v1044 = vpack.c.bf16 %v1029, %v1028
          %v1045 = vpack.c.bf16 %v1031, %v1030
          %v1046 = vpack.c.bf16 %v1033, %v1032
          %v1047 = vpack.c.bf16 %v1035, %v1034
          %v1048 = vpack.c.bf16 %v1037, %v1036
          %v1049 = vpack.c.bf16 %v1039, %v1038
          %v1050 = vpack.c.bf16 %v1041, %v1040
          %v1051 = vpack.c.bf16 %v1043, %v1042
          %v1052 = vld [vmem:[#allocation3] sm:$0xff]
          %v1053 = vld [vmem:[#allocation3 + $0x8] sm:$0xff]
          %v1054 = vld [vmem:[#allocation3 + $0x10] sm:$0xff]
          %v1055 = vld [vmem:[#allocation3 + $0x18] sm:$0xff]
          %v1056 = vld [vmem:[#allocation3 + $0x20] sm:$0xff]
          %v1057 = vld [vmem:[#allocation3 + $0x28] sm:$0xff]
          %v1058 = vld [vmem:[#allocation3 + $0x30] sm:$0xff]
          %v1059 = vld [vmem:[#allocation3 + $0x38] sm:$0xff]
          %v1060 = vld [vmem:[#allocation3 + $0x40] sm:$0xff]
          %v1061 = vld [vmem:[#allocation3 + $0x48] sm:$0xff]
          %v1062 = vld [vmem:[#allocation3 + $0x50] sm:$0xff]
          %v1063 = vld [vmem:[#allocation3 + $0x58] sm:$0xff]
          %v1064 = vld [vmem:[#allocation3 + $0x60] sm:$0xff]
          %v1065 = vld [vmem:[#allocation3 + $0x68] sm:$0xff]
          %v1066 = vld [vmem:[#allocation3 + $0x70] sm:$0xff]
          %v1067 = vld [vmem:[#allocation3 + $0x78] sm:$0xff]
          %v1068 = vld [vmem:[%s4 + $0x40] sm:$0xf]
          %v1069 = vld [vmem:[%s4 + $0x44] sm:$0xf]
          %v1070 = vld [vmem:[%s4 + $0x48] sm:$0xf]
          %v1071 = vld [vmem:[%s4 + $0x4c] sm:$0xf]
          %v1072 = vld [vmem:[%s4 + $0x50] sm:$0xf]
          %v1073 = vld [vmem:[%s4 + $0x54] sm:$0xf]
          %v1074 = vld [vmem:[%s4 + $0x58] sm:$0xf]
          %v1075 = vld [vmem:[%s4 + $0x5c] sm:$0xf]
          %v1076 = vld [vmem:[%s4 + $0x60] sm:$0xf]
          %v1077 = vld [vmem:[%s4 + $0x64] sm:$0xf]
          %v1078 = vld [vmem:[%s4 + $0x68] sm:$0xf]
          %v1079 = vld [vmem:[%s4 + $0x6c] sm:$0xf]
          %v1080 = vld [vmem:[%s4 + $0x70] sm:$0xf]
          %v1081 = vld [vmem:[%s4 + $0x74] sm:$0xf]
          %v1082 = vld [vmem:[%s4 + $0x78] sm:$0xf]
          %v1083 = vld [vmem:[%s4 + $0x7c] sm:$0xf]
          %v1100 = vunpack.c.l.b16 %v1068
          %v1101 = vunpack.c.l.b16 %v1069
          %v1102 = vunpack.c.l.b16 %v1070
          %v1103 = vunpack.c.l.b16 %v1071
          %v1104 = vunpack.c.l.b16 %v1072
          %v1105 = vunpack.c.l.b16 %v1073
          %v1106 = vunpack.c.l.b16 %v1074
          %v1107 = vunpack.c.l.b16 %v1075
          %v1108 = vunpack.c.l.b16 %v1076
          %v1109 = vunpack.c.l.b16 %v1077
          %v1110 = vunpack.c.l.b16 %v1078
          %v1111 = vunpack.c.l.b16 %v1079
          %v1112 = vunpack.c.l.b16 %v1080
          %v1113 = vunpack.c.l.b16 %v1081
          %v1114 = vunpack.c.l.b16 %v1082
          %v1115 = vunpack.c.l.b16 %v1083
          %v1116 = vpack.c.b16 %v1101, %v1100
          %v1117 = vpack.c.b16 %v1103, %v1102
          %v1118 = vpack.c.b16 %v1105, %v1104
          %v1119 = vpack.c.b16 %v1107, %v1106
          %v1120 = vpack.c.b16 %v1109, %v1108
          %v1121 = vpack.c.b16 %v1111, %v1110
          %v1122 = vpack.c.b16 %v1113, %v1112
          %v1123 = vpack.c.b16 %v1115, %v1114
          %1132 = vmatprep.subr.bf16.mxu0 0
          %1133 = vmatpush1.bf16.msra.mxu0 %v1116
          %1134 = vmatprep.subr.bf16.mxu0 0
          %1135 = vmatpush1.bf16.msra.mxu0 %v1117
          %1136 = vmatprep.subr.bf16.mxu0 0
          %1137 = vmatpush1.bf16.msra.mxu0 %v1118
          %1138 = vmatprep.subr.bf16.mxu0 0
          %1139 = vmatpush1.bf16.msra.mxu0 %v1119
          %1140 = vmatprep.subr.bf16.mxu0 0
          %1141 = vmatpush1.bf16.msra.mxu0 %v1120
          %1142 = vmatprep.subr.bf16.mxu0 0
          %1143 = vmatpush1.bf16.msra.mxu0 %v1121
          %1144 = vmatprep.subr.bf16.mxu0 0
          %1145 = vmatpush1.bf16.msra.mxu0 %v1122
          %1146 = vmatprep.subr.bf16.mxu0 0
          %1147 = vmatpush1.bf16.msra.mxu0 %v1123
          %1148 = vmatprep.subr.bf16.mxu0 0
          %1149 = vmatpush1.bf16.msra.mxu0 0
          %1150 = vmatprep.subr.bf16.mxu0 0
          %1151 = vmatpush1.bf16.msra.mxu0 0
          %1152 = vmatprep.subr.bf16.mxu0 0
          %1153 = vmatpush1.bf16.msra.mxu0 0
          %1154 = vmatprep.subr.bf16.mxu0 0
          %1155 = vmatpush1.bf16.msra.mxu0 0
          %1156 = vmatprep.subr.bf16.mxu0 0
          %1157 = vmatpush1.bf16.msra.mxu0 0
          %1158 = vmatprep.subr.bf16.mxu0 0
          %1159 = vmatpush1.bf16.msra.mxu0 0
          %1160 = vmatprep.subr.bf16.mxu0 0
          %1161 = vmatpush1.bf16.msra.mxu0 0
          %1162 = vmatprep.subr.bf16.mxu0 0
          %1163 = vmatpush1.bf16.msra.mxu0 0
          %1164 = vmatprep.mubr.bf16.mxu0 0
          %1165 = vmatmul.mubr.bf16.gmra.mrb[0].mxu0 %v1044
          %v1166 = vpop.f32.mrb[0].mxu0
          %v1167 = vadd.f32 0.0, %v1166
          %v1168 = vpop.f32.mrb[0].mxu0
          %v1169 = vpop.f32.mrb[0].mxu0
          %v1170 = vadd.f32 0.0, %v1169
          %v1171 = vpop.f32.mrb[0].mxu0
          %1172 = vmatprep.mubr.bf16.mxu0 0
          %1173 = vmatmul.mubr.bf16.gmra.mrb[0].mxu0 %v1045
          %v1174 = vpop.f32.mrb[0].mxu0
          %v1175 = vadd.f32 0.0, %v1174
          %v1176 = vpop.f32.mrb[0].mxu0
          %v1177 = vpop.f32.mrb[0].mxu0
          %v1178 = vadd.f32 0.0, %v1177
          %v1179 = vpop.f32.mrb[0].mxu0
          %1180 = vmatprep.mubr.bf16.mxu0 0
          %1181 = vmatmul.mubr.bf16.gmra.mrb[0].mxu0 %v1046
          %v1182 = vpop.f32.mrb[0].mxu0
          %v1183 = vadd.f32 0.0, %v1182
          %v1184 = vpop.f32.mrb[0].mxu0
          %v1185 = vpop.f32.mrb[0].mxu0
          %v1186 = vadd.f32 0.0, %v1185
          %v1187 = vpop.f32.mrb[0].mxu0
          %1188 = vmatprep.mubr.bf16.mxu0 0
          %1189 = vmatmul.mubr.bf16.gmra.mrb[0].mxu0 %v1047
          %v1190 = vpop.f32.mrb[0].mxu0
          %v1191 = vadd.f32 0.0, %v1190
          %v1192 = vpop.f32.mrb[0].mxu0
          %v1193 = vpop.f32.mrb[0].mxu0
          %v1194 = vadd.f32 0.0, %v1193
          %v1195 = vpop.f32.mrb[0].mxu0
          %1196 = vmatprep.mubr.bf16.mxu0 0
          %1197 = vmatmul.mubr.bf16.gmra.mrb[0].mxu0 %v1048
          %v1198 = vpop.f32.mrb[0].mxu0
          %v1199 = vadd.f32 0.0, %v1198
          %v1200 = vpop.f32.mrb[0].mxu0
          %v1201 = vpop.f32.mrb[0].mxu0
          %v1202 = vadd.f32 0.0, %v1201
          %v1203 = vpop.f32.mrb[0].mxu0
          %1204 = vmatprep.mubr.bf16.mxu0 0
          %1205 = vmatmul.mubr.bf16.gmra.mrb[0].mxu0 %v1049
          %v1206 = vpop.f32.mrb[0].mxu0
          %v1207 = vadd.f32 0.0, %v1206
          %v1208 = vpop.f32.mrb[0].mxu0
          %v1209 = vpop.f32.mrb[0].mxu0
          %v1210 = vadd.f32 0.0, %v1209
          %v1211 = vpop.f32.mrb[0].mxu0
          %1212 = vmatprep.mubr.bf16.mxu0 0
          %1213 = vmatmul.mubr.bf16.gmra.mrb[0].mxu0 %v1050
          %v1214 = vpop.f32.mrb[0].mxu0
          %v1215 = vadd.f32 0.0, %v1214
          %v1216 = vpop.f32.mrb[0].mxu0
          %v1217 = vpop.f32.mrb[0].mxu0
          %v1218 = vadd.f32 0.0, %v1217
          %v1219 = vpop.f32.mrb[0].mxu0
          %1220 = vmatprep.mubr.bf16.mxu0 0
          %1221 = vmatmul.mubr.bf16.gmra.mrb[0].mxu0 %v1051
          %v1222 = vpop.f32.mrb[0].mxu0
          %v1223 = vadd.f32 0.0, %v1222
          %v1224 = vpop.f32.mrb[0].mxu0
          %v1225 = vpop.f32.mrb[0].mxu0
          %v1226 = vadd.f32 0.0, %v1225
          %v1227 = vpop.f32.mrb[0].mxu0
          %1228 = vdwg.mxu0
          %v1229 = vadd.f32 %v1052, %v1167
          %v1230 = vadd.f32 %v1053, %v1170
          %v1231 = vadd.f32 %v1054, %v1175
          %v1232 = vadd.f32 %v1055, %v1178
          %v1233 = vadd.f32 %v1056, %v1183
          %v1234 = vadd.f32 %v1057, %v1186
          %v1235 = vadd.f32 %v1058, %v1191
          %v1236 = vadd.f32 %v1059, %v1194
          %v1237 = vadd.f32 %v1060, %v1199
          %v1238 = vadd.f32 %v1061, %v1202
          %v1239 = vadd.f32 %v1062, %v1207
          %v1240 = vadd.f32 %v1063, %v1210
          %v1241 = vadd.f32 %v1064, %v1215
          %v1242 = vadd.f32 %v1065, %v1218
          %v1243 = vadd.f32 %v1066, %v1223
          %v1244 = vadd.f32 %v1067, %v1226
          %v1245 = vld [vmem:[%s5] sm:$0x1]
          %v1247 = vlaneseq
          %v1248 = vshrl.u32 %v1247, 7
          %v1249 = vsub.s32 0, %v1248
          %v1250 = vrot.slane %v1245, %v1249
          %v1252 = vadd.f32 %v1229, %v1250
          %v1253 = vadd.f32 %v1230, %v1250
          %v1254 = vadd.f32 %v1231, %v1250
          %v1255 = vadd.f32 %v1232, %v1250
          %v1256 = vadd.f32 %v1233, %v1250
          %v1257 = vadd.f32 %v1234, %v1250
          %v1258 = vadd.f32 %v1235, %v1250
          %v1259 = vadd.f32 %v1236, %v1250
          %v1260 = vadd.f32 %v1237, %v1250
          %v1261 = vadd.f32 %v1238, %v1250
          %v1262 = vadd.f32 %v1239, %v1250
          %v1263 = vadd.f32 %v1240, %v1250
          %v1264 = vadd.f32 %v1241, %v1250
          %v1265 = vadd.f32 %v1242, %v1250
          %v1266 = vadd.f32 %v1243, %v1250
          %v1267 = vadd.f32 %v1244, %v1250
          %1268 = vst [vmem:[%s318] sm:$0xff] %v1252
          %1269 = vst [vmem:[%s318 + $0x8] sm:$0xff] %v1253
          %1270 = vst [vmem:[%s318 + $0x10] sm:$0xff] %v1254
          %1271 = vst [vmem:[%s318 + $0x18] sm:$0xff] %v1255
          %1272 = vst [vmem:[%s318 + $0x20] sm:$0xff] %v1256
          %1273 = vst [vmem:[%s318 + $0x28] sm:$0xff] %v1257
          %1274 = vst [vmem:[%s318 + $0x30] sm:$0xff] %v1258
          %1275 = vst [vmem:[%s318 + $0x38] sm:$0xff] %v1259
          %1276 = vst [vmem:[%s318 + $0x40] sm:$0xff] %v1260
          %1277 = vst [vmem:[%s318 + $0x48] sm:$0xff] %v1261
          %1278 = vst [vmem:[%s318 + $0x50] sm:$0xff] %v1262
          %1279 = vst [vmem:[%s318 + $0x58] sm:$0xff] %v1263
          %1280 = vst [vmem:[%s318 + $0x60] sm:$0xff] %v1264
          %1281 = vst [vmem:[%s318 + $0x68] sm:$0xff] %v1265
          %1282 = vst [vmem:[%s318 + $0x70] sm:$0xff] %v1266
          %1283 = vst [vmem:[%s318 + $0x78] sm:$0xff] %v1267
        $region56: #{graphsage_forward.3} parent=43 // pred_fallthru
          _
        %s1284 = sand.u32 %s188, 1
        %s1285 = scalar_lea.sflag [#allocation5], %s1284
        %s1286 = sand.u32 %s188, 1
        %s1287 = smul.addr %s1286, 128
        %s1288 = scalar_lea.vmem [#allocation4], %s1287
        // Predicated region
        $region57: #{graphsage_forward.3} parent=43 // pred_check
          %p1289 = pneg %p198
        $region58: #{graphsage_forward.3} parent=43 // pred_check_branch
          %1291 = sbr.rel (%p1289) target = $region60
        $region59: #{graphsage_forward.3} parent=43 // pred_region
          %s1292 = smul.u32 16, %s24
          %s1294 = ssub.s32 2048, 2048
          %1295 = vsyncadd %s1285, %s1294
          %s1296 = smul.addr %s1292, 128
          %s1297 = scalar_lea.hbm %s6, %s1296
          %s1298 = sshll.u32 %s1288, 4
          %s1299 = int_to_ptr.vmem [resolvable:$true] %s1298
          %1304 = dma.vmem_to_hbm [thread:$0]  %s1299, 2048, %s1297, %s1285, 128, 128, 8
        $region60: #{graphsage_forward.3} parent=43 // pred_fallthru
          _
      $region44: #{graphsage_forward.3} parent=5 // pred_fallthru
        _
      %p1305 = scmp.le.s32.totalorder 2, %s15
      // Predicated region
      $region61: #{graphsage_forward.3} parent=5 // pred_check
        %p1306 = pneg %p1305
      $region62: #{graphsage_forward.3} parent=5 // pred_check_branch
        %1308 = sbr.rel (%p1306) target = $region64
      $region63: #{graphsage_forward.3} parent=5 // pred_region
        %s1309 = ssub.s32 %s15, 2
        // Predicated region
        $region65: #{graphsage_forward.3} parent=63 // pred_check
          %p1310 = pneg %p204
        $region66: #{graphsage_forward.3} parent=63 // pred_check_branch
          %1312 = sbr.rel (%p1310) target = $region68
        $region67: #{graphsage_forward.3} parent=63 // pred_region
          %s1313 = sand.u32 %s189, 1
          %s1314 = scalar_lea.sflag [#allocation5], %s1313
          %s1315 = sand.u32 %s189, 1
          %s1316 = smul.addr %s1315, 128
          %s1317 = scalar_lea.vmem [#allocation4], %s1316
          %1318 = dma.done %s1314, 2048
        $region68: #{graphsage_forward.3} parent=63 // pred_fallthru
          _
      $region64: #{graphsage_forward.3} parent=5 // pred_fallthru
        _
    $region6: #{graphsage_forward.3} parent=1 // loop_footer
      %s19 = sadd.s32 1, %s15
    $region7: #{graphsage_forward.3} parent=1 // loop_footer_branch
      %14 = sbr.rel target = $region3
    $region8: #{graphsage_forward.3} parent=1 // loop_exit
      _
    %1319 = vsyncpa [#allocation5], 1
    %s1320 = scalar_lea.sflag [#allocation5], 1
    %1321 = vsyncpa %s1320, 1

</llo_original>
